<compile_context>
chip_gen: v6e
topology: v6e:2x2x1
jax: 0.10.0
libtpu: 0.0.40
codegen_flags: <defaults>
</compile_context>

<pallas_src>
import functools

import jax
import jax.numpy as jnp
from jax.experimental import pallas as pl
from jax.experimental.pallas import tpu as pltpu

LEAKY_SLOPE = 0.1   # get_activation('leaky') in GCMC -> LeakyReLU(0.1)
LANE = 128          # decoder output padded to a lane-dense slab, sliced in the wrapper


def _leaky(x):
    return jnp.where(x > 0, x, LEAKY_SLOPE * x)


# ----------------------------------------------------------------------------
# Single fused kernel: encoder layer 0 + encoder layer 1 + BiDecoder
#
# inputs (all whole-array VMEM blocks, gridless call), in order:
#   aw_u : (Nu, R*Ni)    wide adjacency      aw_u[u, r*Ni + i] = A_r[u, i]
#   aw_i : (Ni, R*Nu)    wide transposed     aw_i[i, r*Nu + u] = A_r[u, i]
#   uf   : (Nu, Din0)    user features
#   if   : (Ni, Din0)    item features
#   per layer l: w_l   (R*Din_l, Dagg_l)  stacked basis-composed weights
#                fcw_l (Dagg_l, Dout_l), fcb_l (1, Dout_l)
#   gu   : (E, Nu)  one-hot row-gather for dec_graph src nodes
#   gi   : (E, Ni)  one-hot row-gather for dec_graph dst nodes
#   pcat : (Dout, B*Dout)  concatenated decoder bases P_b
#   comb : (B, 128)        combine weights, lane-padded (cols >= num_classes are 0)
# outputs:
#   uo   : (Nu, Dout)   user_out  = u0 + sum_{l>0} u_l / (l+1)
#   io   : (Ni, Dout)   movie_out = i0 + sum_{l>0} i_l / (l+1)
#   pred : (E, 128)     lane-padded predicted ratings (slice [:, :C] outside)
# ----------------------------------------------------------------------------
def _fused_net_kernel(*refs, num_ratings, num_layers, num_basis):
    R = num_ratings
    L = num_layers

    aw_u_ref, aw_i_ref, uf_ref, if_ref = refs[0:4]
    layer_refs = refs[4:4 + 3 * L]
    gu_ref, gi_ref, pcat_ref, comb_ref = refs[4 + 3 * L:8 + 3 * L]
    uo_ref, io_ref, pred_ref = refs[8 + 3 * L:]

    aw_u = aw_u_ref[...]            # (Nu, R*Ni)
    aw_i = aw_i_ref[...]            # (Ni, R*Nu)

    def block_diag(feat):
        # (n, d) -> (R*n, R*d) block-diagonal stack, built from static concatenates
        # (no in-kernel reshapes / transposes).
        n, d = feat.shape
        z = jnp.zeros((n, d), feat.dtype)
        rows = [
            jnp.concatenate([feat if c == r else z for c in range(R)], axis=1)
            for r in range(R)
        ]
        return jnp.concatenate(rows, axis=0)

    def gcmc_layer(feat_u, feat_i, w_ref, fcw_ref, fcb_ref):
        w = w_ref[...]              # (R*Din, Dagg)
        fcw = fcw_ref[...]          # (Dagg, Dout)
        fcb = fcb_ref[...]          # (1, Dout)

        def side(a_wide, src_feat):
            # Adjacency aggregation for ALL ratings at once, directly in the
            # (Ndst, R*Din) layout (single MXU dot against block-diag features) ...
            b = jnp.dot(a_wide, block_diag(src_feat),
                        preferred_element_type=jnp.float32)        # (Ndst, R*Din)
            # ... then ONE K = R*Din contraction with the stacked per-rating weights
            # (replaces the old R-step register-accumulator unroll).
            agg = jnp.dot(b, w, preferred_element_type=jnp.float32)  # (Ndst, Dagg)
            h = jnp.dot(_leaky(agg), fcw,
                        preferred_element_type=jnp.float32) + fcb
            return _leaky(h)

        # users aggregate item features; items aggregate user features
        return side(aw_u, feat_i), side(aw_i, feat_u)

    feat_u = uf_ref[...]
    feat_i = if_ref[...]
    user_out = movie_out = None
    for l in range(L):              # static unroll over encoder layers
        w_ref, fcw_ref, fcb_ref = layer_refs[3 * l:3 * l + 3]
        u_o, i_o = gcmc_layer(feat_u, feat_i, w_ref, fcw_ref, fcb_ref)
        if l == 0:
            user_out, movie_out = u_o, i_o
        else:
            inv = jnp.float32(1.0 / float(l + 1))
            user_out = user_out + u_o * inv
            movie_out = movie_out + i_o * inv
        feat_u, feat_i = u_o, i_o

    uo_ref[...] = user_out
    io_ref[...] = movie_out

    # ---- BiDecoder (fused; one-hot gather == MXU op at these sizes) ----
    ue = jnp.dot(gu_ref[...], user_out, preferred_element_type=jnp.float32)    # (E, D)
    ie = jnp.dot(gi_ref[...], movie_out, preferred_element_type=jnp.float32)   # (E, D)
    D = ue.shape[1]
    t = jnp.dot(ue, pcat_ref[...], preferred_element_type=jnp.float32)         # (E, B*D)
    cols = [jnp.sum(t[:, b * D:(b + 1) * D] * ie, axis=1, keepdims=True)
            for b in range(num_basis)]                                         # each (E, 1)
    s = jnp.concatenate(cols, axis=1)                                          # (E, B)
    # lane-dense (E, 128) writeback; combine matrix pre-padded with zero lanes
    pred_ref[...] = jnp.dot(s, comb_ref[...], preferred_element_type=jnp.float32)


# ----------------------------------------------------------------------------
# Net forward: parameter preprocessing + one fused pallas_call + XLA reg loss
# ----------------------------------------------------------------------------
def net_forward(params, adj, ufeat, ifeat, uid, iid, *, rating_vals, layers):
    R = len(rating_vals)
    Nu, Ni = adj.shape[1], adj.shape[2]
    Dout = params["enc"][-1]["fc_w"].shape[1]
    E = uid.shape[0]

    # Adjacency relayouts (pure transpose/reshape, done once per forward in XLA).
    a_wide_u = jnp.transpose(adj, (1, 0, 2)).reshape(Nu, R * Ni)   # [u, r*Ni + i]
    a_wide_i = jnp.transpose(adj, (2, 0, 1)).reshape(Ni, R * Nu)   # [i, r*Nu + u]

    # Basis-composed weights per encoder layer (few-KFLOP matmuls -> keep in XLA so
    # the stacked-layout reshape is free; W only travels a few KB into the kernel).
    layer_ops = []
    w_flat0 = None
    for i in range(layers):
        p = params["enc"][i]
        w_flat = jnp.dot(p["att"], p["basis"],
                         precision=jax.lax.Precision.HIGHEST)      # (R, in*agg)
        if i == 0:
            w_flat0 = w_flat
        w_stack = w_flat.reshape(R * p["in_dim"], p["agg_dim"])    # (R*in, agg)
        layer_ops += [w_stack, p["fc_w"], p["fc_b"]]

    # Decoder preprocessing: concatenated bases + lane-padded combine + one-hot gathers.
    P, comb = params["dec_P"], params["dec_comb"]
    num_basis, D, _ = P.shape
    num_classes = comb.shape[1]
    pcat = jnp.transpose(P, (1, 0, 2)).reshape(D, num_basis * D)   # (D, B*D)
    comb_pad = jnp.zeros((num_basis, LANE), jnp.float32).at[:, :num_classes].set(comb)
    gu = jax.nn.one_hot(uid, Nu, dtype=jnp.float32)                # (E, Nu)
    gi = jax.nn.one_hot(iid, Ni, dtype=jnp.float32)                # (E, Ni)

    vmem = pl.BlockSpec(memory_space=pltpu.MemorySpace.VMEM)
    n_in = 4 + 3 * layers + 4
    user_out, movie_out, pred_pad = pl.pallas_call(
        functools.partial(_fused_net_kernel, num_ratings=R,
                          num_layers=layers, num_basis=num_basis),
        out_shape=(
            jax.ShapeDtypeStruct((Nu, Dout), jnp.float32),
            jax.ShapeDtypeStruct((Ni, Dout), jnp.float32),
            jax.ShapeDtypeStruct((E, LANE), jnp.float32),
        ),
        in_specs=[vmem] * n_in,
        out_specs=(vmem, vmem, vmem),
    )(a_wide_u, a_wide_i, ufeat, ifeat, *layer_ops, gu, gi, pcat, comb_pad)

    pred_ratings = pred_pad[:, :num_classes]

    # Cosine-similarity regularizer on encoder[0]'s composed W (XLA, per review):
    # torch.cosine_similarity(W[r], W[r-1], dim=1) reduces over the agg axis.
    in0, agg0 = params["enc"][0]["in_dim"], params["enc"][0]["agg_dim"]
    W0 = w_flat0.reshape(R, in0, agg0)
    eps = jnp.float32(1e-8)
    a, b = W0[1:], W0[:-1]
    dot_ab = jnp.sum(a * b, axis=2)
    na = jnp.maximum(jnp.sqrt(jnp.sum(a * a, axis=2)), eps)
    nb = jnp.maximum(jnp.sqrt(jnp.sum(b * b, axis=2)), eps)
    reg_loss = -jnp.sum(dot_ab / (na * nb))

    return pred_ratings, reg_loss, user_out, movie_out, W0


# ----------------------------------------------------------------------------
# Deterministic parameter / input construction
# ----------------------------------------------------------------------------
def make_params(key, *, R, src_in, agg0, out_units, basis_units, num_basis, num_classes):
    ks = jax.random.split(key, 10)
    enc0 = dict(
        in_dim=src_in, agg_dim=agg0,
        att=0.1 * jax.random.normal(ks[0], (R, basis_units), jnp.float32),
        basis=0.1 * jax.random.normal(ks[1], (basis_units, src_in * agg0), jnp.float32),
        fc_w=0.1 * jax.random.normal(ks[2], (agg0, out_units), jnp.float32),
        fc_b=0.01 * jax.random.normal(ks[3], (1, out_units), jnp.float32),
    )
    enc1 = dict(
        in_dim=out_units, agg_dim=out_units,
        att=0.1 * jax.random.normal(ks[4], (R, basis_units), jnp.float32),
        basis=0.1 * jax.random.normal(ks[5], (basis_units, out_units * out_units), jnp.float32),
        fc_w=0.1 * jax.random.normal(ks[6], (out_units, out_units), jnp.float32),
        fc_b=0.01 * jax.random.normal(ks[7], (1, out_units), jnp.float32),
    )
    dec_P = 0.1 * jax.random.normal(ks[8], (num_basis, out_units, out_units), jnp.float32)
    dec_comb = 0.1 * jax.random.normal(ks[9], (num_basis, num_classes), jnp.float32)
    return dict(enc=[enc0, enc1], dec_P=dec_P, dec_comb=dec_comb)


if __name__ == "__main__":
    # Small, forward-consistent sizes (Nu/Ni/E kept multiples of 8 sublanes)
    rating_vals = [1, 2, 3]
    R = len(rating_vals)
    Nu, Ni = 16, 24
    src_in_units = 32           # == dst_in_units (share_param)
    gcn_agg_units = 32
    gcn_out_units = 16
    basis_units = 4
    num_basis = 2               # gen_r_num_basis_func
    num_classes = R             # Bi decoder
    layers = 2
    E = 40                      # dec_graph edges

    key = jax.random.PRNGKey(0)
    k_adj, k_uf, k_if, k_uid, k_iid, k_par = jax.random.split(key, 6)

    # enc_graph: each (u,i) pair gets a rating in [0, R] where R == no edge
    assign = jax.random.randint(k_adj, (Nu, Ni), 0, R + 1)
    onehot = jax.nn.one_hot(assign, R + 1, dtype=jnp.float32)[..., :R]  # (Nu, Ni, R)
    adj = jnp.transpose(onehot, (2, 0, 1))                              # (R, Nu, Ni)
    deg_u = jnp.maximum(adj.sum(axis=(0, 2)), 1.0)
    deg_i = jnp.maximum(adj.sum(axis=(0, 1)), 1.0)
    norm = (1.0 / jnp.sqrt(deg_u))[:, None] * (1.0 / jnp.sqrt(deg_i))[None, :]
    adj = adj * norm[None]

    ufeat = jax.random.normal(k_uf, (Nu, src_in_units), jnp.float32)
    ifeat = jax.random.normal(k_if, (Ni, src_in_units), jnp.float32)

    # dec_graph edge list
    uid = jax.random.randint(k_uid, (E,), 0, Nu)
    iid = jax.random.randint(k_iid, (E,), 0, Ni)

    params = make_params(
        k_par, R=R, src_in=src_in_units, agg0=gcn_agg_units,
        out_units=gcn_out_units, basis_units=basis_units,
        num_basis=num_basis, num_classes=num_classes,
    )

    pred_ratings, reg_loss, user_out, movie_out, W = net_forward(
        params, adj, ufeat, ifeat, uid, iid,
        rating_vals=rating_vals, layers=layers,
    )
    jax.block_until_ready((pred_ratings, reg_loss, user_out, movie_out, W))

    assert pred_ratings.shape == (E, num_classes)
    assert user_out.shape == (Nu, gcn_out_units)
    assert movie_out.shape == (Ni, gcn_out_units)
    assert W.shape == (R, src_in_units, gcn_agg_units)
    print("KERNEL_OK")
</pallas_src>

<mosaic_0001>
module attributes {stable_mosaic.version = 11 : i64} {
  func.func @_fused_net_kernel(%arg0: memref<16x72xf32, #tpu.memory_space<vmem>>, %arg1: memref<24x48xf32, #tpu.memory_space<vmem>>, %arg2: memref<16x32xf32, #tpu.memory_space<vmem>>, %arg3: memref<24x32xf32, #tpu.memory_space<vmem>>, %arg4: memref<96x32xf32, #tpu.memory_space<vmem>>, %arg5: memref<32x16xf32, #tpu.memory_space<vmem>>, %arg6: memref<1x16xf32, #tpu.memory_space<vmem>>, %arg7: memref<48x16xf32, #tpu.memory_space<vmem>>, %arg8: memref<16x16xf32, #tpu.memory_space<vmem>>, %arg9: memref<1x16xf32, #tpu.memory_space<vmem>>, %arg10: memref<40x16xf32, #tpu.memory_space<vmem>>, %arg11: memref<40x24xf32, #tpu.memory_space<vmem>>, %arg12: memref<16x32xf32, #tpu.memory_space<vmem>>, %arg13: memref<2x128xf32, #tpu.memory_space<vmem>>, %arg14: memref<16x16xf32, #tpu.memory_space<vmem>>, %arg15: memref<24x16xf32, #tpu.memory_space<vmem>>, %arg16: memref<40x128xf32, #tpu.memory_space<vmem>>) attributes {dimension_semantics = [], scalar_prefetch = 0 : i64, scratch_operands = 0 : i64, tpu.core_type = #tpu.core_type<tc>} {
    %c0 = arith.constant 0 : index
    %c0_0 = arith.constant 0 : index
    %0 = vector.load %arg0[%c0, %c0_0] : memref<16x72xf32, #tpu.memory_space<vmem>>, vector<16x72xf32>
    %c0_1 = arith.constant 0 : index
    %c0_2 = arith.constant 0 : index
    %1 = vector.load %arg1[%c0_1, %c0_2] : memref<24x48xf32, #tpu.memory_space<vmem>>, vector<24x48xf32>
    %c0_3 = arith.constant 0 : index
    %c0_4 = arith.constant 0 : index
    %2 = vector.load %arg2[%c0_3, %c0_4] : memref<16x32xf32, #tpu.memory_space<vmem>>, vector<16x32xf32>
    %c0_5 = arith.constant 0 : index
    %c0_6 = arith.constant 0 : index
    %3 = vector.load %arg3[%c0_5, %c0_6] : memref<24x32xf32, #tpu.memory_space<vmem>>, vector<24x32xf32>
    %c0_7 = arith.constant 0 : index
    %c0_8 = arith.constant 0 : index
    %4 = vector.load %arg4[%c0_7, %c0_8] : memref<96x32xf32, #tpu.memory_space<vmem>>, vector<96x32xf32>
    %c0_9 = arith.constant 0 : index
    %c0_10 = arith.constant 0 : index
    %5 = vector.load %arg5[%c0_9, %c0_10] : memref<32x16xf32, #tpu.memory_space<vmem>>, vector<32x16xf32>
    %c0_11 = arith.constant 0 : index
    %c0_12 = arith.constant 0 : index
    %6 = vector.load %arg6[%c0_11, %c0_12] : memref<1x16xf32, #tpu.memory_space<vmem>>, vector<1x16xf32>
    %cst = arith.constant 0.000000e+00 : f32
    %7 = vector.broadcast %cst : f32 to vector<24x32xf32>
    %8 = tpu.concatenate %3, %7, %7 in 1 : vector<24x32xf32>, vector<24x32xf32>, vector<24x32xf32> -> vector<24x96xf32>
    %9 = tpu.concatenate %7, %3, %7 in 1 : vector<24x32xf32>, vector<24x32xf32>, vector<24x32xf32> -> vector<24x96xf32>
    %10 = tpu.concatenate %7, %7, %3 in 1 : vector<24x32xf32>, vector<24x32xf32>, vector<24x32xf32> -> vector<24x96xf32>
    %11 = tpu.concatenate %8, %9, %10 in 0 : vector<24x96xf32>, vector<24x96xf32>, vector<24x96xf32> -> vector<72x96xf32>
    %cst_13 = arith.constant dense<0.000000e+00> : vector<16x96xf32>
    %12 = tpu.matmul %0, %11, %cst_13 {dimension_numbers = #tpu.dot_dimension_numbers<[1], [0], [0], [1], [0, 0, 1, 1], [], []>} : vector<16x72xf32>, vector<72x96xf32>, vector<16x96xf32> -> vector<16x96xf32>
    %cst_14 = arith.constant dense<0.000000e+00> : vector<16x32xf32>
    %13 = tpu.matmul %12, %4, %cst_14 {dimension_numbers = #tpu.dot_dimension_numbers<[1], [0], [0], [1], [0, 0, 1, 1], [], []>} : vector<16x96xf32>, vector<96x32xf32>, vector<16x32xf32> -> vector<16x32xf32>
    %cst_15 = arith.constant 0.000000e+00 : f32
    %14 = vector.broadcast %cst_15 : f32 to vector<16x32xf32>
    %15 = arith.cmpf ogt, %13, %14 : vector<16x32xf32>
    %cst_16 = arith.constant 1.000000e-01 : f32
    %16 = vector.broadcast %cst_16 : f32 to vector<16x32xf32>
    %17 = arith.mulf %16, %13 : vector<16x32xf32>
    %18 = arith.select %15, %13, %17 : vector<16x32xi1>, vector<16x32xf32>
    %cst_17 = arith.constant dense<0.000000e+00> : vector<16x16xf32>
    %19 = tpu.matmul %18, %5, %cst_17 {dimension_numbers = #tpu.dot_dimension_numbers<[1], [0], [0], [1], [0, 0, 1, 1], [], []>} : vector<16x32xf32>, vector<32x16xf32>, vector<16x16xf32> -> vector<16x16xf32>
    %20 = vector.broadcast %6 : vector<1x16xf32> to vector<16x16xf32>
    %21 = arith.addf %19, %20 : vector<16x16xf32>
    %cst_18 = arith.constant 0.000000e+00 : f32
    %22 = vector.broadcast %cst_18 : f32 to vector<16x16xf32>
    %23 = arith.cmpf ogt, %21, %22 : vector<16x16xf32>
    %cst_19 = arith.constant 1.000000e-01 : f32
    %24 = vector.broadcast %cst_19 : f32 to vector<16x16xf32>
    %25 = arith.mulf %24, %21 : vector<16x16xf32>
    %26 = arith.select %23, %21, %25 : vector<16x16xi1>, vector<16x16xf32>
    %cst_20 = arith.constant 0.000000e+00 : f32
    %27 = vector.broadcast %cst_20 : f32 to vector<16x32xf32>
    %28 = tpu.concatenate %2, %27, %27 in 1 : vector<16x32xf32>, vector<16x32xf32>, vector<16x32xf32> -> vector<16x96xf32>
    %29 = tpu.concatenate %27, %2, %27 in 1 : vector<16x32xf32>, vector<16x32xf32>, vector<16x32xf32> -> vector<16x96xf32>
    %30 = tpu.concatenate %27, %27, %2 in 1 : vector<16x32xf32>, vector<16x32xf32>, vector<16x32xf32> -> vector<16x96xf32>
    %31 = tpu.concatenate %28, %29, %30 in 0 : vector<16x96xf32>, vector<16x96xf32>, vector<16x96xf32> -> vector<48x96xf32>
    %cst_21 = arith.constant dense<0.000000e+00> : vector<24x96xf32>
    %32 = tpu.matmul %1, %31, %cst_21 {dimension_numbers = #tpu.dot_dimension_numbers<[1], [0], [0], [1], [0, 0, 1, 1], [], []>} : vector<24x48xf32>, vector<48x96xf32>, vector<24x96xf32> -> vector<24x96xf32>
    %cst_22 = arith.constant dense<0.000000e+00> : vector<24x32xf32>
    %33 = tpu.matmul %32, %4, %cst_22 {dimension_numbers = #tpu.dot_dimension_numbers<[1], [0], [0], [1], [0, 0, 1, 1], [], []>} : vector<24x96xf32>, vector<96x32xf32>, vector<24x32xf32> -> vector<24x32xf32>
    %cst_23 = arith.constant 0.000000e+00 : f32
    %34 = vector.broadcast %cst_23 : f32 to vector<24x32xf32>
    %35 = arith.cmpf ogt, %33, %34 : vector<24x32xf32>
    %cst_24 = arith.constant 1.000000e-01 : f32
    %36 = vector.broadcast %cst_24 : f32 to vector<24x32xf32>
    %37 = arith.mulf %36, %33 : vector<24x32xf32>
    %38 = arith.select %35, %33, %37 : vector<24x32xi1>, vector<24x32xf32>
    %cst_25 = arith.constant dense<0.000000e+00> : vector<24x16xf32>
    %39 = tpu.matmul %38, %5, %cst_25 {dimension_numbers = #tpu.dot_dimension_numbers<[1], [0], [0], [1], [0, 0, 1, 1], [], []>} : vector<24x32xf32>, vector<32x16xf32>, vector<24x16xf32> -> vector<24x16xf32>
    %40 = vector.broadcast %6 : vector<1x16xf32> to vector<24x16xf32>
    %41 = arith.addf %39, %40 : vector<24x16xf32>
    %cst_26 = arith.constant 0.000000e+00 : f32
    %42 = vector.broadcast %cst_26 : f32 to vector<24x16xf32>
    %43 = arith.cmpf ogt, %41, %42 : vector<24x16xf32>
    %cst_27 = arith.constant 1.000000e-01 : f32
    %44 = vector.broadcast %cst_27 : f32 to vector<24x16xf32>
    %45 = arith.mulf %44, %41 : vector<24x16xf32>
    %46 = arith.select %43, %41, %45 : vector<24x16xi1>, vector<24x16xf32>
    %c0_28 = arith.constant 0 : index
    %c0_29 = arith.constant 0 : index
    %47 = vector.load %arg7[%c0_28, %c0_29] : memref<48x16xf32, #tpu.memory_space<vmem>>, vector<48x16xf32>
    %c0_30 = arith.constant 0 : index
    %c0_31 = arith.constant 0 : index
    %48 = vector.load %arg8[%c0_30, %c0_31] : memref<16x16xf32, #tpu.memory_space<vmem>>, vector<16x16xf32>
    %c0_32 = arith.constant 0 : index
    %c0_33 = arith.constant 0 : index
    %49 = vector.load %arg9[%c0_32, %c0_33] : memref<1x16xf32, #tpu.memory_space<vmem>>, vector<1x16xf32>
    %cst_34 = arith.constant 0.000000e+00 : f32
    %50 = vector.broadcast %cst_34 : f32 to vector<24x16xf32>
    %51 = tpu.concatenate %46, %50, %50 in 1 : vector<24x16xf32>, vector<24x16xf32>, vector<24x16xf32> -> vector<24x48xf32>
    %52 = tpu.concatenate %50, %46, %50 in 1 : vector<24x16xf32>, vector<24x16xf32>, vector<24x16xf32> -> vector<24x48xf32>
    %53 = tpu.concatenate %50, %50, %46 in 1 : vector<24x16xf32>, vector<24x16xf32>, vector<24x16xf32> -> vector<24x48xf32>
    %54 = tpu.concatenate %51, %52, %53 in 0 : vector<24x48xf32>, vector<24x48xf32>, vector<24x48xf32> -> vector<72x48xf32>
    %cst_35 = arith.constant dense<0.000000e+00> : vector<16x48xf32>
    %55 = tpu.matmul %0, %54, %cst_35 {dimension_numbers = #tpu.dot_dimension_numbers<[1], [0], [0], [1], [0, 0, 1, 1], [], []>} : vector<16x72xf32>, vector<72x48xf32>, vector<16x48xf32> -> vector<16x48xf32>
    %cst_36 = arith.constant dense<0.000000e+00> : vector<16x16xf32>
    %56 = tpu.matmul %55, %47, %cst_36 {dimension_numbers = #tpu.dot_dimension_numbers<[1], [0], [0], [1], [0, 0, 1, 1], [], []>} : vector<16x48xf32>, vector<48x16xf32>, vector<16x16xf32> -> vector<16x16xf32>
    %cst_37 = arith.constant 0.000000e+00 : f32
    %57 = vector.broadcast %cst_37 : f32 to vector<16x16xf32>
    %58 = arith.cmpf ogt, %56, %57 : vector<16x16xf32>
    %cst_38 = arith.constant 1.000000e-01 : f32
    %59 = vector.broadcast %cst_38 : f32 to vector<16x16xf32>
    %60 = arith.mulf %59, %56 : vector<16x16xf32>
    %61 = arith.select %58, %56, %60 : vector<16x16xi1>, vector<16x16xf32>
    %cst_39 = arith.constant dense<0.000000e+00> : vector<16x16xf32>
    %62 = tpu.matmul %61, %48, %cst_39 {dimension_numbers = #tpu.dot_dimension_numbers<[1], [0], [0], [1], [0, 0, 1, 1], [], []>} : vector<16x16xf32>, vector<16x16xf32>, vector<16x16xf32> -> vector<16x16xf32>
    %63 = vector.broadcast %49 : vector<1x16xf32> to vector<16x16xf32>
    %64 = arith.addf %62, %63 : vector<16x16xf32>
    %cst_40 = arith.constant 0.000000e+00 : f32
    %65 = vector.broadcast %cst_40 : f32 to vector<16x16xf32>
    %66 = arith.cmpf ogt, %64, %65 : vector<16x16xf32>
    %cst_41 = arith.constant 1.000000e-01 : f32
    %67 = vector.broadcast %cst_41 : f32 to vector<16x16xf32>
    %68 = arith.mulf %67, %64 : vector<16x16xf32>
    %69 = arith.select %66, %64, %68 : vector<16x16xi1>, vector<16x16xf32>
    %cst_42 = arith.constant 0.000000e+00 : f32
    %70 = vector.broadcast %cst_42 : f32 to vector<16x16xf32>
    %71 = tpu.concatenate %26, %70, %70 in 1 : vector<16x16xf32>, vector<16x16xf32>, vector<16x16xf32> -> vector<16x48xf32>
    %72 = tpu.concatenate %70, %26, %70 in 1 : vector<16x16xf32>, vector<16x16xf32>, vector<16x16xf32> -> vector<16x48xf32>
    %73 = tpu.concatenate %70, %70, %26 in 1 : vector<16x16xf32>, vector<16x16xf32>, vector<16x16xf32> -> vector<16x48xf32>
    %74 = tpu.concatenate %71, %72, %73 in 0 : vector<16x48xf32>, vector<16x48xf32>, vector<16x48xf32> -> vector<48x48xf32>
    %cst_43 = arith.constant dense<0.000000e+00> : vector<24x48xf32>
    %75 = tpu.matmul %1, %74, %cst_43 {dimension_numbers = #tpu.dot_dimension_numbers<[1], [0], [0], [1], [0, 0, 1, 1], [], []>} : vector<24x48xf32>, vector<48x48xf32>, vector<24x48xf32> -> vector<24x48xf32>
    %cst_44 = arith.constant dense<0.000000e+00> : vector<24x16xf32>
    %76 = tpu.matmul %75, %47, %cst_44 {dimension_numbers = #tpu.dot_dimension_numbers<[1], [0], [0], [1], [0, 0, 1, 1], [], []>} : vector<24x48xf32>, vector<48x16xf32>, vector<24x16xf32> -> vector<24x16xf32>
    %cst_45 = arith.constant 0.000000e+00 : f32
    %77 = vector.broadcast %cst_45 : f32 to vector<24x16xf32>
    %78 = arith.cmpf ogt, %76, %77 : vector<24x16xf32>
    %cst_46 = arith.constant 1.000000e-01 : f32
    %79 = vector.broadcast %cst_46 : f32 to vector<24x16xf32>
    %80 = arith.mulf %79, %76 : vector<24x16xf32>
    %81 = arith.select %78, %76, %80 : vector<24x16xi1>, vector<24x16xf32>
    %cst_47 = arith.constant dense<0.000000e+00> : vector<24x16xf32>
    %82 = tpu.matmul %81, %48, %cst_47 {dimension_numbers = #tpu.dot_dimension_numbers<[1], [0], [0], [1], [0, 0, 1, 1], [], []>} : vector<24x16xf32>, vector<16x16xf32>, vector<24x16xf32> -> vector<24x16xf32>
    %83 = vector.broadcast %49 : vector<1x16xf32> to vector<24x16xf32>
    %84 = arith.addf %82, %83 : vector<24x16xf32>
    %cst_48 = arith.constant 0.000000e+00 : f32
    %85 = vector.broadcast %cst_48 : f32 to vector<24x16xf32>
    %86 = arith.cmpf ogt, %84, %85 : vector<24x16xf32>
    %cst_49 = arith.constant 1.000000e-01 : f32
    %87 = vector.broadcast %cst_49 : f32 to vector<24x16xf32>
    %88 = arith.mulf %87, %84 : vector<24x16xf32>
    %89 = arith.select %86, %84, %88 : vector<24x16xi1>, vector<24x16xf32>
    %cst_50 = arith.constant 5.000000e-01 : f32
    %90 = vector.broadcast %cst_50 : f32 to vector<16x16xf32>
    %91 = arith.mulf %69, %90 : vector<16x16xf32>
    %92 = arith.addf %26, %91 : vector<16x16xf32>
    %cst_51 = arith.constant 5.000000e-01 : f32
    %93 = vector.broadcast %cst_51 : f32 to vector<24x16xf32>
    %94 = arith.mulf %89, %93 : vector<24x16xf32>
    %95 = arith.addf %46, %94 : vector<24x16xf32>
    %c0_52 = arith.constant 0 : index
    %c0_53 = arith.constant 0 : index
    %96 = vector.load %arg14[%c0_52, %c0_53] : memref<16x16xf32, #tpu.memory_space<vmem>>, vector<16x16xf32>
    tpu.vector_store %arg14[%c0_52, %c0_53], %92 {strides = array<i32>} : memref<16x16xf32, #tpu.memory_space<vmem>>, vector<16x16xf32>,
    %c0_54 = arith.constant 0 : index
    %c0_55 = arith.constant 0 : index
    %97 = vector.load %arg15[%c0_54, %c0_55] : memref<24x16xf32, #tpu.memory_space<vmem>>, vector<24x16xf32>
    tpu.vector_store %arg15[%c0_54, %c0_55], %95 {strides = array<i32>} : memref<24x16xf32, #tpu.memory_space<vmem>>, vector<24x16xf32>,
    %c0_56 = arith.constant 0 : index
    %c0_57 = arith.constant 0 : index
    %98 = vector.load %arg10[%c0_56, %c0_57] : memref<40x16xf32, #tpu.memory_space<vmem>>, vector<40x16xf32>
    %cst_58 = arith.constant dense<0.000000e+00> : vector<40x16xf32>
    %99 = tpu.matmul %98, %92, %cst_58 {dimension_numbers = #tpu.dot_dimension_numbers<[1], [0], [0], [1], [0, 0, 1, 1], [], []>} : vector<40x16xf32>, vector<16x16xf32>, vector<40x16xf32> -> vector<40x16xf32>
    %c0_59 = arith.constant 0 : index
    %c0_60 = arith.constant 0 : index
    %100 = vector.load %arg11[%c0_59, %c0_60] : memref<40x24xf32, #tpu.memory_space<vmem>>, vector<40x24xf32>
    %cst_61 = arith.constant dense<0.000000e+00> : vector<40x16xf32>
    %101 = tpu.matmul %100, %95, %cst_61 {dimension_numbers = #tpu.dot_dimension_numbers<[1], [0], [0], [1], [0, 0, 1, 1], [], []>} : vector<40x24xf32>, vector<24x16xf32>, vector<40x16xf32> -> vector<40x16xf32>
    %c0_62 = arith.constant 0 : index
    %c0_63 = arith.constant 0 : index
    %102 = vector.load %arg12[%c0_62, %c0_63] : memref<16x32xf32, #tpu.memory_space<vmem>>, vector<16x32xf32>
    %cst_64 = arith.constant dense<0.000000e+00> : vector<40x32xf32>
    %103 = tpu.matmul %99, %102, %cst_64 {dimension_numbers = #tpu.dot_dimension_numbers<[1], [0], [0], [1], [0, 0, 1, 1], [], []>} : vector<40x16xf32>, vector<16x32xf32>, vector<40x32xf32> -> vector<40x32xf32>
    %104 = vector.extract_strided_slice %103 {offsets = [0, 0], sizes = [40, 16], strides = [1, 1]} : vector<40x32xf32> to vector<40x16xf32>
    %105 = arith.mulf %104, %101 : vector<40x16xf32>
    %cst_65 = arith.constant dense<0.000000e+00> : vector<40xf32>
    %106 = vector.multi_reduction <add>, %105, %cst_65 [1] : vector<40x16xf32> to vector<40xf32>
    %107 = vector.shape_cast %106 : vector<40xf32> to vector<40x1xf32>
    %108 = vector.extract_strided_slice %103 {offsets = [0, 16], sizes = [40, 16], strides = [1, 1]} : vector<40x32xf32> to vector<40x16xf32>
    %109 = arith.mulf %108, %101 : vector<40x16xf32>
    %cst_66 = arith.constant dense<0.000000e+00> : vector<40xf32>
    %110 = vector.multi_reduction <add>, %109, %cst_66 [1] : vector<40x16xf32> to vector<40xf32>
    %111 = vector.shape_cast %110 : vector<40xf32> to vector<40x1xf32>
    %112 = tpu.concatenate %107, %111 in 1 : vector<40x1xf32>, vector<40x1xf32> -> vector<40x2xf32>
    %c0_67 = arith.constant 0 : index
    %c0_68 = arith.constant 0 : index
    %113 = vector.load %arg13[%c0_67, %c0_68] : memref<2x128xf32, #tpu.memory_space<vmem>>, vector<2x128xf32>
    %cst_69 = arith.constant dense<0.000000e+00> : vector<40x128xf32>
    %114 = tpu.matmul %112, %113, %cst_69 {dimension_numbers = #tpu.dot_dimension_numbers<[1], [0], [0], [1], [0, 0, 1, 1], [], []>} : vector<40x2xf32>, vector<2x128xf32>, vector<40x128xf32> -> vector<40x128xf32>
    %c0_70 = arith.constant 0 : index
    %c0_71 = arith.constant 0 : index
    %115 = vector.load %arg16[%c0_70, %c0_71] : memref<40x128xf32, #tpu.memory_space<vmem>>, vector<40x128xf32>
    tpu.vector_store %arg16[%c0_70, %c0_71], %114 {strides = array<i32>} : memref<40x128xf32, #tpu.memory_space<vmem>>, vector<40x128xf32>,
    return
  }
}

</mosaic_0001>

<llo_original>
// kernel: tpu_custom_call.1
$region0: #{tpu_custom_call.1}
  #allocation0 [shape = 'u32[]', space=smem, size = 0x4, offset = 0x4, fixed_abs, tag = 'smem constant byte address 0x4 - core index']
  #allocation1 [shape = 'u32[144,128]{1,0:T(1,128)}', space=vmem, size = 0x12000, scoped, tag = 'internal scratch']
  %s0 = inlined_call_operand.vmem [shape: f32[16,72], index: 0, kind: input, shape index: {}]
  %s1 = inlined_call_operand.vmem [shape: f32[24,48], index: 1, kind: input, shape index: {}]
  %s2 = inlined_call_operand.vmem [shape: f32[16,32], index: 2, kind: input, shape index: {}]
  %s3 = inlined_call_operand.vmem [shape: f32[24,32], index: 3, kind: input, shape index: {}]
  %s4 = inlined_call_operand.vmem [shape: f32[96,32], index: 4, kind: input, shape index: {}]
  %s5 = inlined_call_operand.vmem [shape: f32[32,16], index: 5, kind: input, shape index: {}]
  %s6 = inlined_call_operand.vmem [shape: f32[1,16], index: 6, kind: input, shape index: {}]
  %s7 = inlined_call_operand.vmem [shape: f32[48,16], index: 7, kind: input, shape index: {}]
  %s8 = inlined_call_operand.vmem [shape: f32[16,16], index: 8, kind: input, shape index: {}]
  %s9 = inlined_call_operand.vmem [shape: f32[1,16], index: 9, kind: input, shape index: {}]
  %s10 = inlined_call_operand.vmem [shape: f32[40,16], index: 10, kind: input, shape index: {}]
  %s11 = inlined_call_operand.vmem [shape: f32[40,24], index: 11, kind: input, shape index: {}]
  %s12 = inlined_call_operand.vmem [shape: f32[16,32], index: 12, kind: input, shape index: {}]
  %s13 = inlined_call_operand.vmem [shape: f32[2,128], index: 13, kind: input, shape index: {}]
  %s14 = inlined_call_operand.hbm [shape: f32[16,16], index: 14, kind: output, shape index: {0}]
  %s15 = inlined_call_operand.vmem [shape: f32[24,16], index: 15, kind: output, shape index: {1}]
  %s16 = inlined_call_operand.hbm [shape: f32[40,128], index: 16, kind: output, shape index: {2}]
  %17 = xla_tuple %s14, %s15, %s16
  %s18 = sld [smem:[#allocation0]]
  $region82: #{tpu_custom_call.1} parent=0
    _
  %s20 = ssub.s32 1, %s18
  %s21 = scalar_select 0, %s20, %s18
  $region1: #{tpu_custom_call.1} parent=0
    #allocation2 [shape = 'u8[8192]{0}', space=vmem, size = 0x2000, scoped, tag = 'output window, operand 0, single buffered']
    #allocation3 [shape = 's32[1]{0}', space=sflag, size = 0x4, scoped, tag = 'scoped memory for tpu_custom_call.1']
    #allocation4 [shape = 'u8[20480]{0}', space=vmem, size = 0x5000, scoped, tag = 'output window, operand 2, single buffered']
    #allocation5 [shape = 's32[1]{0}', space=sflag, size = 0x4, scoped, tag = 'scoped memory for tpu_custom_call.1']
    %22 = vsyncpa [#allocation3], 0
    %23 = vsyncpa [#allocation5], 0
    // Predicated region
    $region2: #{tpu_custom_call.1} parent=1 // pred_check
      _
    $region3: #{tpu_custom_call.1} parent=1 // pred_check_branch
      %25 = sbr.rel (0) target = $region5
    $region4: #{tpu_custom_call.1} parent=1 // pred_region
      _
    $region5: #{tpu_custom_call.1} parent=1 // pred_fallthru
      _
    // Predicated region
    $region6: #{tpu_custom_call.1} parent=1 // pred_check
      _
    $region7: #{tpu_custom_call.1} parent=1 // pred_check_branch
      %27 = sbr.rel (0) target = $region9
    $region8: #{tpu_custom_call.1} parent=1 // pred_region
      _
    $region9: #{tpu_custom_call.1} parent=1 // pred_fallthru
      _
    // Predicated region
    $region10: #{tpu_custom_call.1} parent=1 // pred_check
      _
    $region11: #{tpu_custom_call.1} parent=1 // pred_check_branch
      %29 = sbr.rel (0) target = $region13
    $region12: #{tpu_custom_call.1} parent=1 // pred_region
      _
    $region13: #{tpu_custom_call.1} parent=1 // pred_fallthru
      _
    // Predicated region
    $region14: #{tpu_custom_call.1} parent=1 // pred_check
      _
    $region15: #{tpu_custom_call.1} parent=1 // pred_check_branch
      %31 = sbr.rel (0) target = $region17
    $region16: #{tpu_custom_call.1} parent=1 // pred_region
      _
    $region17: #{tpu_custom_call.1} parent=1 // pred_fallthru
      _
    // Predicated region
    $region18: #{tpu_custom_call.1} parent=1 // pred_check
      _
    $region19: #{tpu_custom_call.1} parent=1 // pred_check_branch
      %33 = sbr.rel (0) target = $region21
    $region20: #{tpu_custom_call.1} parent=1 // pred_region
      _
    $region21: #{tpu_custom_call.1} parent=1 // pred_fallthru
      _
    // Predicated region
    $region22: #{tpu_custom_call.1} parent=1 // pred_check
      _
    $region23: #{tpu_custom_call.1} parent=1 // pred_check_branch
      %35 = sbr.rel (0) target = $region25
    $region24: #{tpu_custom_call.1} parent=1 // pred_region
      _
    $region25: #{tpu_custom_call.1} parent=1 // pred_fallthru
      _
    // Predicated region
    $region26: #{tpu_custom_call.1} parent=1 // pred_check
      _
    $region27: #{tpu_custom_call.1} parent=1 // pred_check_branch
      %37 = sbr.rel (0) target = $region29
    $region28: #{tpu_custom_call.1} parent=1 // pred_region
      _
    $region29: #{tpu_custom_call.1} parent=1 // pred_fallthru
      _
    // Predicated region
    $region30: #{tpu_custom_call.1} parent=1 // pred_check
      _
    $region31: #{tpu_custom_call.1} parent=1 // pred_check_branch
      %39 = sbr.rel (0) target = $region33
    $region32: #{tpu_custom_call.1} parent=1 // pred_region
      _
    $region33: #{tpu_custom_call.1} parent=1 // pred_fallthru
      _
    // Predicated region
    $region34: #{tpu_custom_call.1} parent=1 // pred_check
      _
    $region35: #{tpu_custom_call.1} parent=1 // pred_check_branch
      %41 = sbr.rel (0) target = $region37
    $region36: #{tpu_custom_call.1} parent=1 // pred_region
      _
    $region37: #{tpu_custom_call.1} parent=1 // pred_fallthru
      _
    // Predicated region
    $region38: #{tpu_custom_call.1} parent=1 // pred_check
      _
    $region39: #{tpu_custom_call.1} parent=1 // pred_check_branch
      %43 = sbr.rel (0) target = $region41
    $region40: #{tpu_custom_call.1} parent=1 // pred_region
      _
    $region41: #{tpu_custom_call.1} parent=1 // pred_fallthru
      _
    // Predicated region
    $region42: #{tpu_custom_call.1} parent=1 // pred_check
      _
    $region43: #{tpu_custom_call.1} parent=1 // pred_check_branch
      %45 = sbr.rel (0) target = $region45
    $region44: #{tpu_custom_call.1} parent=1 // pred_region
      _
    $region45: #{tpu_custom_call.1} parent=1 // pred_fallthru
      _
    // Predicated region
    $region46: #{tpu_custom_call.1} parent=1 // pred_check
      _
    $region47: #{tpu_custom_call.1} parent=1 // pred_check_branch
      %47 = sbr.rel (0) target = $region49
    $region48: #{tpu_custom_call.1} parent=1 // pred_region
      _
    $region49: #{tpu_custom_call.1} parent=1 // pred_fallthru
      _
    // Predicated region
    $region50: #{tpu_custom_call.1} parent=1 // pred_check
      _
    $region51: #{tpu_custom_call.1} parent=1 // pred_check_branch
      %49 = sbr.rel (0) target = $region53
    $region52: #{tpu_custom_call.1} parent=1 // pred_region
      _
    $region53: #{tpu_custom_call.1} parent=1 // pred_fallthru
      _
    // Predicated region
    $region54: #{tpu_custom_call.1} parent=1 // pred_check
      _
    $region55: #{tpu_custom_call.1} parent=1 // pred_check_branch
      %51 = sbr.rel (0) target = $region57
    $region56: #{tpu_custom_call.1} parent=1 // pred_region
      _
    $region57: #{tpu_custom_call.1} parent=1 // pred_fallthru
      _
    %v52 = vld [vmem:[%s0] sm:$0xff]
    %v53 = vld [vmem:[%s0 + $0x8] sm:$0xff]
    %v54 = vld [vmem:[%s1] sm:$0xff]
    %v55 = vld [vmem:[%s1 + $0x8] sm:$0xff]
    %v56 = vld [vmem:[%s1 + $0x10] sm:$0xff]
    %v57 = vld [vmem:[%s2] sm:$0xff]
    %v58 = vld [vmem:[%s2 + $0x8] sm:$0xff]
    %v59 = vld [vmem:[%s3] sm:$0xff]
    %v60 = vld [vmem:[%s3 + $0x8] sm:$0xff]
    %v61 = vld [vmem:[%s3 + $0x10] sm:$0xff]
    %v62 = vld [vmem:[%s4] sm:$0xff]
    %v63 = vld [vmem:[%s4 + $0x8] sm:$0xff]
    %v64 = vld [vmem:[%s4 + $0x10] sm:$0xff]
    %v65 = vld [vmem:[%s4 + $0x18] sm:$0xff]
    %v66 = vld [vmem:[%s4 + $0x20] sm:$0xff]
    %v67 = vld [vmem:[%s4 + $0x28] sm:$0xff]
    %v68 = vld [vmem:[%s4 + $0x30] sm:$0xff]
    %v69 = vld [vmem:[%s4 + $0x38] sm:$0xff]
    %v70 = vld [vmem:[%s4 + $0x40] sm:$0xff]
    %v71 = vld [vmem:[%s4 + $0x48] sm:$0xff]
    %v72 = vld [vmem:[%s4 + $0x50] sm:$0xff]
    %v73 = vld [vmem:[%s4 + $0x58] sm:$0xff]
    %v74 = vld [vmem:[%s5] sm:$0xff]
    %v75 = vld [vmem:[%s5 + $0x8] sm:$0xff]
    %v76 = vld [vmem:[%s5 + $0x10] sm:$0xff]
    %v77 = vld [vmem:[%s5 + $0x18] sm:$0xff]
    %v78 = vld [vmem:[%s6] sm:$0x1]
    %vm79 = vcmask 261120
    %v80 = vsel %vm79, %v59, 0.0
    %v81 = vsel %vm79, %v60, 0.0
    %v82 = vsel %vm79, %v61, 0.0
    %vm83 = vcmask 523264
    %v84 = vsel %vm83, %v80, 0.0
    %v85 = vsel %vm83, %v81, 0.0
    %v86 = vsel %vm83, %v82, 0.0
    %90 = vrot.lane.b32.xlu0 %v59, 32
    %v91 = vpop.permute.xlu0 %90
    %92 = vrot.lane.b32.xlu0 %v60, 32
    %v93 = vpop.permute.xlu0 %92
    %94 = vrot.lane.b32.xlu0 %v61, 32
    %v95 = vpop.permute.xlu0 %94
    %v99 = vsel %vm79, 0.0, %v91
    %v100 = vsel %vm79, 0.0, %v93
    %v101 = vsel %vm79, 0.0, %v95
    %v102 = vsel %vm83, %v99, 0.0
    %v103 = vsel %vm83, %v100, 0.0
    %v104 = vsel %vm83, %v101, 0.0
    %105 = vrot.lane.b32.xlu0 %v59, 64
    %v106 = vpop.permute.xlu0 %105
    %107 = vrot.lane.b32.xlu0 %v60, 64
    %v108 = vpop.permute.xlu0 %107
    %109 = vrot.lane.b32.xlu0 %v61, 64
    %v110 = vpop.permute.xlu0 %109
    %v114 = vsel %vm83, 0.0, %v106
    %v115 = vsel %vm83, 0.0, %v108
    %v116 = vsel %vm83, 0.0, %v110
    %vm117 = vcmask 588800
    %v119 = vsel %vm117, %v52, 0
    %v122 = vsel %vm117, %v53, 0
    %124 = vmatprep.subr.mxu0 0.0
    %125 = vmatpush1.msra.mxu0 0.0
    %126 = vmatprep.subr.mxu0 0.0
    %127 = vmatpush1.msra.mxu0 0.0
    %128 = vmatprep.subr.mxu0 0.0
    %129 = vmatpush1.msra.mxu0 0.0
    %130 = vmatprep.subr.mxu0 0.0
    %131 = vmatpush1.msra.mxu0 0.0
    %132 = vmatprep.subr.mxu0 0.0
    %133 = vmatpush1.msra.mxu0 0.0
    %134 = vmatprep.subr.mxu0 0.0
    %135 = vmatpush1.msra.mxu0 0.0
    %136 = vmatprep.subr.mxu0 0.0
    %137 = vmatpush1.msra.mxu0 0.0
    %138 = vmatprep.subr.mxu0 0.0
    %139 = vmatpush1.msra.mxu0 %v116
    %140 = vmatprep.subr.mxu0 0.0
    %141 = vmatpush1.msra.mxu0 %v115
    %142 = vmatprep.subr.mxu0 0.0
    %143 = vmatpush1.msra.mxu0 %v114
    %144 = vmatprep.subr.mxu0 0.0
    %145 = vmatpush1.msra.mxu0 %v104
    %146 = vmatprep.subr.mxu0 0.0
    %147 = vmatpush1.msra.mxu0 %v103
    %148 = vmatprep.subr.mxu0 0.0
    %149 = vmatpush1.msra.mxu0 %v102
    %150 = vmatprep.subr.mxu0 0.0
    %151 = vmatpush1.msra.mxu0 %v86
    %152 = vmatprep.subr.mxu0 0.0
    %153 = vmatpush1.msra.mxu0 %v85
    %154 = vmatprep.subr.mxu0 0.0
    %155 = vmatpush1.msra.mxu0 %v84
    %156 = vmatprep.subr.mxu0 0.0
    %157 = vmatpush2.msra.mxu0 0.0
    %158 = vmatprep.subr.mxu0 0.0
    %159 = vmatpush2.msra.mxu0 0.0
    %160 = vmatprep.subr.mxu0 0.0
    %161 = vmatpush2.msra.mxu0 0.0
    %162 = vmatprep.subr.mxu0 0.0
    %163 = vmatpush2.msra.mxu0 0.0
    %164 = vmatprep.subr.mxu0 0.0
    %165 = vmatpush2.msra.mxu0 0.0
    %166 = vmatprep.subr.mxu0 0.0
    %167 = vmatpush2.msra.mxu0 0.0
    %168 = vmatprep.subr.mxu0 0.0
    %169 = vmatpush2.msra.mxu0 0.0
    %170 = vmatprep.subr.mxu0 0.0
    %171 = vmatpush2.msra.mxu0 0.0
    %172 = vmatprep.subr.mxu0 0.0
    %173 = vmatpush2.msra.mxu0 0.0
    %174 = vmatprep.subr.mxu0 0.0
    %175 = vmatpush2.msra.mxu0 0.0
    %176 = vmatprep.subr.mxu0 0.0
    %177 = vmatpush2.msra.mxu0 0.0
    %178 = vmatprep.subr.mxu0 0.0
    %179 = vmatpush2.msra.mxu0 0.0
    %180 = vmatprep.subr.mxu0 0.0
    %181 = vmatpush2.msra.mxu0 0.0
    %182 = vmatprep.subr.mxu0 0.0
    %183 = vmatpush2.msra.mxu0 0.0
    %184 = vmatprep.subr.mxu0 0.0
    %185 = vmatpush2.msra.mxu0 0.0
    %186 = vmatprep.subr.mxu0 0.0
    %187 = vmatpush2.msra.mxu0 0.0
    %188 = vmatprep.mubr.f32.mxu0 0.0
    %189 = vmatmul.mubr.f32.gmra.mxu0 %v119
    %v190 = vpop.f32.mrf.mxu0
    %v191 = vadd.f32 0.0, %v190
    %v192 = vpop.f32.mrf.mxu0
    %193 = vmatprep.mubr.f32.mxu0 0.0
    %194 = vmatmul.mubr.f32.gmra.mxu0 %v122
    %v195 = vpop.f32.mrf.mxu0
    %v196 = vadd.f32 0.0, %v195
    %v197 = vpop.f32.mrf.mxu0
    %198 = vdwg.mxu0
    %vm199 = vcmask 785408
    %v201 = vsel %vm199, %v191, 0
    %v204 = vsel %vm199, %v196, 0
    %206 = vmatprep.subr.mxu0 0.0
    %207 = vmatpush1.msra.mxu0 0.0
    %208 = vmatprep.subr.mxu0 0.0
    %209 = vmatpush1.msra.mxu0 0.0
    %210 = vmatprep.subr.mxu0 0.0
    %211 = vmatpush1.msra.mxu0 0.0
    %212 = vmatprep.subr.mxu0 0.0
    %213 = vmatpush1.msra.mxu0 0.0
    %214 = vmatprep.subr.mxu0 0.0
    %215 = vmatpush1.msra.mxu0 %v73
    %216 = vmatprep.subr.mxu0 0.0
    %217 = vmatpush1.msra.mxu0 %v72
    %218 = vmatprep.subr.mxu0 0.0
    %219 = vmatpush1.msra.mxu0 %v71
    %220 = vmatprep.subr.mxu0 0.0
    %221 = vmatpush1.msra.mxu0 %v70
    %222 = vmatprep.subr.mxu0 0.0
    %223 = vmatpush1.msra.mxu0 %v69
    %224 = vmatprep.subr.mxu0 0.0
    %225 = vmatpush1.msra.mxu0 %v68
    %226 = vmatprep.subr.mxu0 0.0
    %227 = vmatpush1.msra.mxu0 %v67
    %228 = vmatprep.subr.mxu0 0.0
    %229 = vmatpush1.msra.mxu0 %v66
    %230 = vmatprep.subr.mxu0 0.0
    %231 = vmatpush1.msra.mxu0 %v65
    %232 = vmatprep.subr.mxu0 0.0
    %233 = vmatpush1.msra.mxu0 %v64
    %234 = vmatprep.subr.mxu0 0.0
    %235 = vmatpush1.msra.mxu0 %v63
    %236 = vmatprep.subr.mxu0 0.0
    %237 = vmatpush1.msra.mxu0 %v62
    %238 = vmatprep.subr.mxu0 0.0
    %239 = vmatpush2.msra.mxu0 0.0
    %240 = vmatprep.subr.mxu0 0.0
    %241 = vmatpush2.msra.mxu0 0.0
    %242 = vmatprep.subr.mxu0 0.0
    %243 = vmatpush2.msra.mxu0 0.0
    %244 = vmatprep.subr.mxu0 0.0
    %245 = vmatpush2.msra.mxu0 0.0
    %246 = vmatprep.subr.mxu0 0.0
    %247 = vmatpush2.msra.mxu0 0.0
    %248 = vmatprep.subr.mxu0 0.0
    %249 = vmatpush2.msra.mxu0 0.0
    %250 = vmatprep.subr.mxu0 0.0
    %251 = vmatpush2.msra.mxu0 0.0
    %252 = vmatprep.subr.mxu0 0.0
    %253 = vmatpush2.msra.mxu0 0.0
    %254 = vmatprep.subr.mxu0 0.0
    %255 = vmatpush2.msra.mxu0 0.0
    %256 = vmatprep.subr.mxu0 0.0
    %257 = vmatpush2.msra.mxu0 0.0
    %258 = vmatprep.subr.mxu0 0.0
    %259 = vmatpush2.msra.mxu0 0.0
    %260 = vmatprep.subr.mxu0 0.0
    %261 = vmatpush2.msra.mxu0 0.0
    %262 = vmatprep.subr.mxu0 0.0
    %263 = vmatpush2.msra.mxu0 0.0
    %264 = vmatprep.subr.mxu0 0.0
    %265 = vmatpush2.msra.mxu0 0.0
    %266 = vmatprep.subr.mxu0 0.0
    %267 = vmatpush2.msra.mxu0 0.0
    %268 = vmatprep.subr.mxu0 0.0
    %269 = vmatpush2.msra.mxu0 0.0
    %270 = vmatprep.mubr.f32.mxu0 0.0
    %271 = vmatmul.mubr.f32.gmra.mxu0 %v201
    %v272 = vpop.f32.mrf.mxu0
    %v273 = vadd.f32 0.0, %v272
    %v274 = vpop.f32.mrf.mxu0
    %275 = vmatprep.mubr.f32.mxu0 0.0
    %276 = vmatmul.mubr.f32.gmra.mxu0 %v204
    %v277 = vpop.f32.mrf.mxu0
    %v278 = vadd.f32 0.0, %v277
    %v279 = vpop.f32.mrf.mxu0
    %280 = vdwg.mxu0
    %vm281 = vcmp.gt.f32.partialorder %v273, 0.0
    %vm282 = vcmp.gt.f32.partialorder %v278, 0.0
    %v283 = vmul.f32 %v273, 0.1
    %v284 = vmul.f32 %v278, 0.1
    %v285 = vsel %vm281, %v273, %v283
    %v286 = vsel %vm282, %v278, %v284
    %v288 = vlaneseq
    %v289 = vshrl.u32 %v288, 7
    %v290 = vsub.s32 0, %v289
    %v291 = vrot.slane %v78, %v290
    %v294 = vsel %vm79, %v285, 0
    %v297 = vsel %vm79, %v286, 0
    %299 = vmatprep.subr.mxu0 0.0
    %300 = vmatpush1.msra.mxu0 0.0
    %301 = vmatprep.subr.mxu0 0.0
    %302 = vmatpush1.msra.mxu0 0.0
    %303 = vmatprep.subr.mxu0 0.0
    %304 = vmatpush1.msra.mxu0 0.0
    %305 = vmatprep.subr.mxu0 0.0
    %306 = vmatpush1.msra.mxu0 0.0
    %307 = vmatprep.subr.mxu0 0.0
    %308 = vmatpush1.msra.mxu0 0.0
    %309 = vmatprep.subr.mxu0 0.0
    %310 = vmatpush1.msra.mxu0 0.0
    %311 = vmatprep.subr.mxu0 0.0
    %312 = vmatpush1.msra.mxu0 0.0
    %313 = vmatprep.subr.mxu0 0.0
    %314 = vmatpush1.msra.mxu0 0.0
    %315 = vmatprep.subr.mxu0 0.0
    %316 = vmatpush1.msra.mxu0 0.0
    %317 = vmatprep.subr.mxu0 0.0
    %318 = vmatpush1.msra.mxu0 0.0
    %319 = vmatprep.subr.mxu0 0.0
    %320 = vmatpush1.msra.mxu0 0.0
    %321 = vmatprep.subr.mxu0 0.0
    %322 = vmatpush1.msra.mxu0 0.0
    %323 = vmatprep.subr.mxu0 0.0
    %324 = vmatpush1.msra.mxu0 %v77
    %325 = vmatprep.subr.mxu0 0.0
    %326 = vmatpush1.msra.mxu0 %v76
    %327 = vmatprep.subr.mxu0 0.0
    %328 = vmatpush1.msra.mxu0 %v75
    %329 = vmatprep.subr.mxu0 0.0
    %330 = vmatpush1.msra.mxu0 %v74
    %331 = vmatprep.subr.mxu0 0.0
    %332 = vmatpush2.msra.mxu0 0.0
    %333 = vmatprep.subr.mxu0 0.0
    %334 = vmatpush2.msra.mxu0 0.0
    %335 = vmatprep.subr.mxu0 0.0
    %336 = vmatpush2.msra.mxu0 0.0
    %337 = vmatprep.subr.mxu0 0.0
    %338 = vmatpush2.msra.mxu0 0.0
    %339 = vmatprep.subr.mxu0 0.0
    %340 = vmatpush2.msra.mxu0 0.0
    %341 = vmatprep.subr.mxu0 0.0
    %342 = vmatpush2.msra.mxu0 0.0
    %343 = vmatprep.subr.mxu0 0.0
    %344 = vmatpush2.msra.mxu0 0.0
    %345 = vmatprep.subr.mxu0 0.0
    %346 = vmatpush2.msra.mxu0 0.0
    %347 = vmatprep.subr.mxu0 0.0
    %348 = vmatpush2.msra.mxu0 0.0
    %349 = vmatprep.subr.mxu0 0.0
    %350 = vmatpush2.msra.mxu0 0.0
    %351 = vmatprep.subr.mxu0 0.0
    %352 = vmatpush2.msra.mxu0 0.0
    %353 = vmatprep.subr.mxu0 0.0
    %354 = vmatpush2.msra.mxu0 0.0
    %355 = vmatprep.subr.mxu0 0.0
    %356 = vmatpush2.msra.mxu0 0.0
    %357 = vmatprep.subr.mxu0 0.0
    %358 = vmatpush2.msra.mxu0 0.0
    %359 = vmatprep.subr.mxu0 0.0
    %360 = vmatpush2.msra.mxu0 0.0
    %361 = vmatprep.subr.mxu0 0.0
    %362 = vmatpush2.msra.mxu0 0.0
    %363 = vmatprep.mubr.f32.mxu0 0.0
    %364 = vmatmul.mubr.f32.gmra.mxu0 %v294
    %v365 = vpop.f32.mrf.mxu0
    %v366 = vadd.f32 %v291, %v365
    %v367 = vpop.f32.mrf.mxu0
    %368 = vmatprep.mubr.f32.mxu0 0.0
    %369 = vmatmul.mubr.f32.gmra.mxu0 %v297
    %v370 = vpop.f32.mrf.mxu0
    %v371 = vadd.f32 %v291, %v370
    %v372 = vpop.f32.mrf.mxu0
    %373 = vdwg.mxu0
    %vm374 = vcmp.gt.f32.partialorder %v366, 0.0
    %vm375 = vcmp.gt.f32.partialorder %v371, 0.0
    %v376 = vmul.f32 %v366, 0.1
    %v377 = vmul.f32 %v371, 0.1
    %v378 = vsel %vm374, %v366, %v376
    %v379 = vsel %vm375, %v371, %v377
    %v380 = vsel %vm79, %v57, 0.0
    %v381 = vsel %vm79, %v58, 0.0
    %v382 = vsel %vm83, %v380, 0.0
    %v383 = vsel %vm83, %v381, 0.0
    %386 = vrot.lane.b32.xlu0 %v57, 32
    %v387 = vpop.permute.xlu0 %386
    %388 = vrot.lane.b32.xlu0 %v58, 32
    %v389 = vpop.permute.xlu0 %388
    %v392 = vsel %vm79, 0.0, %v387
    %v393 = vsel %vm79, 0.0, %v389
    %v394 = vsel %vm83, %v392, 0.0
    %v395 = vsel %vm83, %v393, 0.0
    %396 = vrot.lane.b32.xlu0 %v57, 64
    %v397 = vpop.permute.xlu0 %396
    %398 = vrot.lane.b32.xlu0 %v58, 64
    %v399 = vpop.permute.xlu0 %398
    %v402 = vsel %vm83, 0.0, %v397
    %v403 = vsel %vm83, 0.0, %v399
    %vm404 = vcmask 392192
    %v406 = vsel %vm404, %v54, 0
    %v409 = vsel %vm404, %v55, 0
    %v412 = vsel %vm404, %v56, 0
    %414 = vmatprep.subr.mxu0 0.0
    %415 = vmatpush1.msra.mxu0 0.0
    %416 = vmatprep.subr.mxu0 0.0
    %417 = vmatpush1.msra.mxu0 0.0
    %418 = vmatprep.subr.mxu0 0.0
    %419 = vmatpush1.msra.mxu0 0.0
    %420 = vmatprep.subr.mxu0 0.0
    %421 = vmatpush1.msra.mxu0 0.0
    %422 = vmatprep.subr.mxu0 0.0
    %423 = vmatpush1.msra.mxu0 0.0
    %424 = vmatprep.subr.mxu0 0.0
    %425 = vmatpush1.msra.mxu0 0.0
    %426 = vmatprep.subr.mxu0 0.0
    %427 = vmatpush1.msra.mxu0 0.0
    %428 = vmatprep.subr.mxu0 0.0
    %429 = vmatpush1.msra.mxu0 0.0
    %430 = vmatprep.subr.mxu0 0.0
    %431 = vmatpush1.msra.mxu0 0.0
    %432 = vmatprep.subr.mxu0 0.0
    %433 = vmatpush1.msra.mxu0 0.0
    %434 = vmatprep.subr.mxu0 0.0
    %435 = vmatpush1.msra.mxu0 %v403
    %436 = vmatprep.subr.mxu0 0.0
    %437 = vmatpush1.msra.mxu0 %v402
    %438 = vmatprep.subr.mxu0 0.0
    %439 = vmatpush1.msra.mxu0 %v395
    %440 = vmatprep.subr.mxu0 0.0
    %441 = vmatpush1.msra.mxu0 %v394
    %442 = vmatprep.subr.mxu0 0.0
    %443 = vmatpush1.msra.mxu0 %v383
    %444 = vmatprep.subr.mxu0 0.0
    %445 = vmatpush1.msra.mxu0 %v382
    %446 = vmatprep.subr.mxu0 0.0
    %447 = vmatpush2.msra.mxu0 0.0
    %448 = vmatprep.subr.mxu0 0.0
    %449 = vmatpush2.msra.mxu0 0.0
    %450 = vmatprep.subr.mxu0 0.0
    %451 = vmatpush2.msra.mxu0 0.0
    %452 = vmatprep.subr.mxu0 0.0
    %453 = vmatpush2.msra.mxu0 0.0
    %454 = vmatprep.subr.mxu0 0.0
    %455 = vmatpush2.msra.mxu0 0.0
    %456 = vmatprep.subr.mxu0 0.0
    %457 = vmatpush2.msra.mxu0 0.0
    %458 = vmatprep.subr.mxu0 0.0
    %459 = vmatpush2.msra.mxu0 0.0
    %460 = vmatprep.subr.mxu0 0.0
    %461 = vmatpush2.msra.mxu0 0.0
    %462 = vmatprep.subr.mxu0 0.0
    %463 = vmatpush2.msra.mxu0 0.0
    %464 = vmatprep.subr.mxu0 0.0
    %465 = vmatpush2.msra.mxu0 0.0
    %466 = vmatprep.subr.mxu0 0.0
    %467 = vmatpush2.msra.mxu0 0.0
    %468 = vmatprep.subr.mxu0 0.0
    %469 = vmatpush2.msra.mxu0 0.0
    %470 = vmatprep.subr.mxu0 0.0
    %471 = vmatpush2.msra.mxu0 0.0
    %472 = vmatprep.subr.mxu0 0.0
    %473 = vmatpush2.msra.mxu0 0.0
    %474 = vmatprep.subr.mxu0 0.0
    %475 = vmatpush2.msra.mxu0 0.0
    %476 = vmatprep.subr.mxu0 0.0
    %477 = vmatpush2.msra.mxu0 0.0
    %478 = vmatprep.mubr.f32.mxu0 0.0
    %479 = vmatmul.mubr.f32.gmra.mxu0 %v406
    %v480 = vpop.f32.mrf.mxu0
    %v481 = vadd.f32 0.0, %v480
    %v482 = vpop.f32.mrf.mxu0
    %483 = vmatprep.mubr.f32.mxu0 0.0
    %484 = vmatmul.mubr.f32.gmra.mxu0 %v409
    %v485 = vpop.f32.mrf.mxu0
    %v486 = vadd.f32 0.0, %v485
    %v487 = vpop.f32.mrf.mxu0
    %488 = vmatprep.mubr.f32.mxu0 0.0
    %489 = vmatmul.mubr.f32.gmra.mxu0 %v412
    %v490 = vpop.f32.mrf.mxu0
    %v491 = vadd.f32 0.0, %v490
    %v492 = vpop.f32.mrf.mxu0
    %493 = vdwg.mxu0
    %v495 = vsel %vm199, %v481, 0
    %v498 = vsel %vm199, %v486, 0
    %v501 = vsel %vm199, %v491, 0
    %503 = vmatprep.subr.mxu0 0.0
    %504 = vmatpush1.msra.mxu0 0.0
    %505 = vmatprep.subr.mxu0 0.0
    %506 = vmatpush1.msra.mxu0 0.0
    %507 = vmatprep.subr.mxu0 0.0
    %508 = vmatpush1.msra.mxu0 0.0
    %509 = vmatprep.subr.mxu0 0.0
    %510 = vmatpush1.msra.mxu0 0.0
    %511 = vmatprep.subr.mxu0 0.0
    %512 = vmatpush1.msra.mxu0 %v73
    %513 = vmatprep.subr.mxu0 0.0
    %514 = vmatpush1.msra.mxu0 %v72
    %515 = vmatprep.subr.mxu0 0.0
    %516 = vmatpush1.msra.mxu0 %v71
    %517 = vmatprep.subr.mxu0 0.0
    %518 = vmatpush1.msra.mxu0 %v70
    %519 = vmatprep.subr.mxu0 0.0
    %520 = vmatpush1.msra.mxu0 %v69
    %521 = vmatprep.subr.mxu0 0.0
    %522 = vmatpush1.msra.mxu0 %v68
    %523 = vmatprep.subr.mxu0 0.0
    %524 = vmatpush1.msra.mxu0 %v67
    %525 = vmatprep.subr.mxu0 0.0
    %526 = vmatpush1.msra.mxu0 %v66
    %527 = vmatprep.subr.mxu0 0.0
    %528 = vmatpush1.msra.mxu0 %v65
    %529 = vmatprep.subr.mxu0 0.0
    %530 = vmatpush1.msra.mxu0 %v64
    %531 = vmatprep.subr.mxu0 0.0
    %532 = vmatpush1.msra.mxu0 %v63
    %533 = vmatprep.subr.mxu0 0.0
    %534 = vmatpush1.msra.mxu0 %v62
    %535 = vmatprep.subr.mxu0 0.0
    %536 = vmatpush2.msra.mxu0 0.0
    %537 = vmatprep.subr.mxu0 0.0
    %538 = vmatpush2.msra.mxu0 0.0
    %539 = vmatprep.subr.mxu0 0.0
    %540 = vmatpush2.msra.mxu0 0.0
    %541 = vmatprep.subr.mxu0 0.0
    %542 = vmatpush2.msra.mxu0 0.0
    %543 = vmatprep.subr.mxu0 0.0
    %544 = vmatpush2.msra.mxu0 0.0
    %545 = vmatprep.subr.mxu0 0.0
    %546 = vmatpush2.msra.mxu0 0.0
    %547 = vmatprep.subr.mxu0 0.0
    %548 = vmatpush2.msra.mxu0 0.0
    %549 = vmatprep.subr.mxu0 0.0
    %550 = vmatpush2.msra.mxu0 0.0
    %551 = vmatprep.subr.mxu0 0.0
    %552 = vmatpush2.msra.mxu0 0.0
    %553 = vmatprep.subr.mxu0 0.0
    %554 = vmatpush2.msra.mxu0 0.0
    %555 = vmatprep.subr.mxu0 0.0
    %556 = vmatpush2.msra.mxu0 0.0
    %557 = vmatprep.subr.mxu0 0.0
    %558 = vmatpush2.msra.mxu0 0.0
    %559 = vmatprep.subr.mxu0 0.0
    %560 = vmatpush2.msra.mxu0 0.0
    %561 = vmatprep.subr.mxu0 0.0
    %562 = vmatpush2.msra.mxu0 0.0
    %563 = vmatprep.subr.mxu0 0.0
    %564 = vmatpush2.msra.mxu0 0.0
    %565 = vmatprep.subr.mxu0 0.0
    %566 = vmatpush2.msra.mxu0 0.0
    %567 = vmatprep.mubr.f32.mxu0 0.0
    %568 = vmatmul.mubr.f32.gmra.mxu0 %v495
    %v569 = vpop.f32.mrf.mxu0
    %v570 = vadd.f32 0.0, %v569
    %v571 = vpop.f32.mrf.mxu0
    %572 = vmatprep.mubr.f32.mxu0 0.0
    %573 = vmatmul.mubr.f32.gmra.mxu0 %v498
    %v574 = vpop.f32.mrf.mxu0
    %v575 = vadd.f32 0.0, %v574
    %v576 = vpop.f32.mrf.mxu0
    %577 = vmatprep.mubr.f32.mxu0 0.0
    %578 = vmatmul.mubr.f32.gmra.mxu0 %v501
    %v579 = vpop.f32.mrf.mxu0
    %v580 = vadd.f32 0.0, %v579
    %v581 = vpop.f32.mrf.mxu0
    %582 = vdwg.mxu0
    %vm583 = vcmp.gt.f32.partialorder %v570, 0.0
    %vm584 = vcmp.gt.f32.partialorder %v575, 0.0
    %vm585 = vcmp.gt.f32.partialorder %v580, 0.0
    %v586 = vmul.f32 %v570, 0.1
    %v587 = vmul.f32 %v575, 0.1
    %v588 = vmul.f32 %v580, 0.1
    %v589 = vsel %vm583, %v570, %v586
    %v590 = vsel %vm584, %v575, %v587
    %v591 = vsel %vm585, %v580, %v588
    %v593 = vsel %vm79, %v589, 0
    %v596 = vsel %vm79, %v590, 0
    %v599 = vsel %vm79, %v591, 0
    %601 = vmatprep.subr.mxu0 0.0
    %602 = vmatpush1.msra.mxu0 0.0
    %603 = vmatprep.subr.mxu0 0.0
    %604 = vmatpush1.msra.mxu0 0.0
    %605 = vmatprep.subr.mxu0 0.0
    %606 = vmatpush1.msra.mxu0 0.0
    %607 = vmatprep.subr.mxu0 0.0
    %608 = vmatpush1.msra.mxu0 0.0
    %609 = vmatprep.subr.mxu0 0.0
    %610 = vmatpush1.msra.mxu0 0.0
    %611 = vmatprep.subr.mxu0 0.0
    %612 = vmatpush1.msra.mxu0 0.0
    %613 = vmatprep.subr.mxu0 0.0
    %614 = vmatpush1.msra.mxu0 0.0
    %615 = vmatprep.subr.mxu0 0.0
    %616 = vmatpush1.msra.mxu0 0.0
    %617 = vmatprep.subr.mxu0 0.0
    %618 = vmatpush1.msra.mxu0 0.0
    %619 = vmatprep.subr.mxu0 0.0
    %620 = vmatpush1.msra.mxu0 0.0
    %621 = vmatprep.subr.mxu0 0.0
    %622 = vmatpush1.msra.mxu0 0.0
    %623 = vmatprep.subr.mxu0 0.0
    %624 = vmatpush1.msra.mxu0 0.0
    %625 = vmatprep.subr.mxu0 0.0
    %626 = vmatpush1.msra.mxu0 %v77
    %627 = vmatprep.subr.mxu0 0.0
    %628 = vmatpush1.msra.mxu0 %v76
    %629 = vmatprep.subr.mxu0 0.0
    %630 = vmatpush1.msra.mxu0 %v75
    %631 = vmatprep.subr.mxu0 0.0
    %632 = vmatpush1.msra.mxu0 %v74
    %633 = vmatprep.subr.mxu0 0.0
    %634 = vmatpush2.msra.mxu0 0.0
    %635 = vmatprep.subr.mxu0 0.0
    %636 = vmatpush2.msra.mxu0 0.0
    %637 = vmatprep.subr.mxu0 0.0
    %638 = vmatpush2.msra.mxu0 0.0
    %639 = vmatprep.subr.mxu0 0.0
    %640 = vmatpush2.msra.mxu0 0.0
    %641 = vmatprep.subr.mxu0 0.0
    %642 = vmatpush2.msra.mxu0 0.0
    %643 = vmatprep.subr.mxu0 0.0
    %644 = vmatpush2.msra.mxu0 0.0
    %645 = vmatprep.subr.mxu0 0.0
    %646 = vmatpush2.msra.mxu0 0.0
    %647 = vmatprep.subr.mxu0 0.0
    %648 = vmatpush2.msra.mxu0 0.0
    %649 = vmatprep.subr.mxu0 0.0
    %650 = vmatpush2.msra.mxu0 0.0
    %651 = vmatprep.subr.mxu0 0.0
    %652 = vmatpush2.msra.mxu0 0.0
    %653 = vmatprep.subr.mxu0 0.0
    %654 = vmatpush2.msra.mxu0 0.0
    %655 = vmatprep.subr.mxu0 0.0
    %656 = vmatpush2.msra.mxu0 0.0
    %657 = vmatprep.subr.mxu0 0.0
    %658 = vmatpush2.msra.mxu0 0.0
    %659 = vmatprep.subr.mxu0 0.0
    %660 = vmatpush2.msra.mxu0 0.0
    %661 = vmatprep.subr.mxu0 0.0
    %662 = vmatpush2.msra.mxu0 0.0
    %663 = vmatprep.subr.mxu0 0.0
    %664 = vmatpush2.msra.mxu0 0.0
    %665 = vmatprep.mubr.f32.mxu0 0.0
    %666 = vmatmul.mubr.f32.gmra.mxu0 %v593
    %v667 = vpop.f32.mrf.mxu0
    %v668 = vadd.f32 %v291, %v667
    %v669 = vpop.f32.mrf.mxu0
    %670 = vmatprep.mubr.f32.mxu0 0.0
    %671 = vmatmul.mubr.f32.gmra.mxu0 %v596
    %v672 = vpop.f32.mrf.mxu0
    %v673 = vadd.f32 %v291, %v672
    %v674 = vpop.f32.mrf.mxu0
    %675 = vmatprep.mubr.f32.mxu0 0.0
    %676 = vmatmul.mubr.f32.gmra.mxu0 %v599
    %v677 = vpop.f32.mrf.mxu0
    %v678 = vadd.f32 %v291, %v677
    %v679 = vpop.f32.mrf.mxu0
    %680 = vdwg.mxu0
    %vm681 = vcmp.gt.f32.partialorder %v668, 0.0
    %vm682 = vcmp.gt.f32.partialorder %v673, 0.0
    %vm683 = vcmp.gt.f32.partialorder %v678, 0.0
    %v684 = vmul.f32 %v668, 0.1
    %v685 = vmul.f32 %v673, 0.1
    %v686 = vmul.f32 %v678, 0.1
    %v687 = vsel %vm681, %v668, %v684
    %v688 = vsel %vm682, %v673, %v685
    %v689 = vsel %vm683, %v678, %v686
    %v690 = vld [vmem:[%s7] sm:$0xff]
    %v691 = vld [vmem:[%s7 + $0x8] sm:$0xff]
    %v692 = vld [vmem:[%s7 + $0x10] sm:$0xff]
    %v693 = vld [vmem:[%s7 + $0x18] sm:$0xff]
    %v694 = vld [vmem:[%s7 + $0x20] sm:$0xff]
    %v695 = vld [vmem:[%s7 + $0x28] sm:$0xff]
    %v696 = vld [vmem:[%s8] sm:$0xff]
    %v697 = vld [vmem:[%s8 + $0x8] sm:$0xff]
    %v698 = vld [vmem:[%s9] sm:$0x1]
    %vm699 = vcmask 130048
    %v700 = vsel %vm699, %v687, 0.0
    %v701 = vsel %vm699, %v688, 0.0
    %v702 = vsel %vm699, %v689, 0.0
    %v703 = vsel %vm79, %v700, 0.0
    %v704 = vsel %vm79, %v701, 0.0
    %v705 = vsel %vm79, %v702, 0.0
    %709 = vrot.lane.b32.xlu0 %v687, 16
    %v710 = vpop.permute.xlu0 %709
    %711 = vrot.lane.b32.xlu0 %v688, 16
    %v712 = vpop.permute.xlu0 %711
    %713 = vrot.lane.b32.xlu0 %v689, 16
    %v714 = vpop.permute.xlu0 %713
    %v718 = vsel %vm699, 0.0, %v710
    %v719 = vsel %vm699, 0.0, %v712
    %v720 = vsel %vm699, 0.0, %v714
    %v721 = vsel %vm79, %v718, 0.0
    %v722 = vsel %vm79, %v719, 0.0
    %v723 = vsel %vm79, %v720, 0.0
    %724 = vrot.lane.b32.xlu0 %v687, 32
    %v725 = vpop.permute.xlu0 %724
    %726 = vrot.lane.b32.xlu0 %v688, 32
    %v727 = vpop.permute.xlu0 %726
    %728 = vrot.lane.b32.xlu0 %v689, 32
    %v729 = vpop.permute.xlu0 %728
    %v733 = vsel %vm79, 0.0, %v725
    %v734 = vsel %vm79, 0.0, %v727
    %v735 = vsel %vm79, 0.0, %v729
    %736 = vmatprep.subr.mxu0 0.0
    %737 = vmatpush1.msra.mxu0 0.0
    %738 = vmatprep.subr.mxu0 0.0
    %739 = vmatpush1.msra.mxu0 0.0
    %740 = vmatprep.subr.mxu0 0.0
    %741 = vmatpush1.msra.mxu0 0.0
    %742 = vmatprep.subr.mxu0 0.0
    %743 = vmatpush1.msra.mxu0 0.0
    %744 = vmatprep.subr.mxu0 0.0
    %745 = vmatpush1.msra.mxu0 0.0
    %746 = vmatprep.subr.mxu0 0.0
    %747 = vmatpush1.msra.mxu0 0.0
    %748 = vmatprep.subr.mxu0 0.0
    %749 = vmatpush1.msra.mxu0 0.0
    %750 = vmatprep.subr.mxu0 0.0
    %751 = vmatpush1.msra.mxu0 %v735
    %752 = vmatprep.subr.mxu0 0.0
    %753 = vmatpush1.msra.mxu0 %v734
    %754 = vmatprep.subr.mxu0 0.0
    %755 = vmatpush1.msra.mxu0 %v733
    %756 = vmatprep.subr.mxu0 0.0
    %757 = vmatpush1.msra.mxu0 %v723
    %758 = vmatprep.subr.mxu0 0.0
    %759 = vmatpush1.msra.mxu0 %v722
    %760 = vmatprep.subr.mxu0 0.0
    %761 = vmatpush1.msra.mxu0 %v721
    %762 = vmatprep.subr.mxu0 0.0
    %763 = vmatpush1.msra.mxu0 %v705
    %764 = vmatprep.subr.mxu0 0.0
    %765 = vmatpush1.msra.mxu0 %v704
    %766 = vmatprep.subr.mxu0 0.0
    %767 = vmatpush1.msra.mxu0 %v703
    %768 = vmatprep.subr.mxu0 0.0
    %769 = vmatpush2.msra.mxu0 0.0
    %770 = vmatprep.subr.mxu0 0.0
    %771 = vmatpush2.msra.mxu0 0.0
    %772 = vmatprep.subr.mxu0 0.0
    %773 = vmatpush2.msra.mxu0 0.0
    %774 = vmatprep.subr.mxu0 0.0
    %775 = vmatpush2.msra.mxu0 0.0
    %776 = vmatprep.subr.mxu0 0.0
    %777 = vmatpush2.msra.mxu0 0.0
    %778 = vmatprep.subr.mxu0 0.0
    %779 = vmatpush2.msra.mxu0 0.0
    %780 = vmatprep.subr.mxu0 0.0
    %781 = vmatpush2.msra.mxu0 0.0
    %782 = vmatprep.subr.mxu0 0.0
    %783 = vmatpush2.msra.mxu0 0.0
    %784 = vmatprep.subr.mxu0 0.0
    %785 = vmatpush2.msra.mxu0 0.0
    %786 = vmatprep.subr.mxu0 0.0
    %787 = vmatpush2.msra.mxu0 0.0
    %788 = vmatprep.subr.mxu0 0.0
    %789 = vmatpush2.msra.mxu0 0.0
    %790 = vmatprep.subr.mxu0 0.0
    %791 = vmatpush2.msra.mxu0 0.0
    %792 = vmatprep.subr.mxu0 0.0
    %793 = vmatpush2.msra.mxu0 0.0
    %794 = vmatprep.subr.mxu0 0.0
    %795 = vmatpush2.msra.mxu0 0.0
    %796 = vmatprep.subr.mxu0 0.0
    %797 = vmatpush2.msra.mxu0 0.0
    %798 = vmatprep.subr.mxu0 0.0
    %799 = vmatpush2.msra.mxu0 0.0
    %800 = vmatprep.mubr.f32.mxu0 0.0
    %801 = vmatmul.mubr.f32.gmra.mxu0 %v119
    %v802 = vpop.f32.mrf.mxu0
    %v803 = vadd.f32 0.0, %v802
    %v804 = vpop.f32.mrf.mxu0
    %805 = vmatprep.mubr.f32.mxu0 0.0
    %806 = vmatmul.mubr.f32.gmra.mxu0 %v122
    %v807 = vpop.f32.mrf.mxu0
    %v808 = vadd.f32 0.0, %v807
    %v809 = vpop.f32.mrf.mxu0
    %810 = vdwg.mxu0
    %v812 = vsel %vm404, %v803, 0
    %v815 = vsel %vm404, %v808, 0
    %817 = vmatprep.subr.mxu0 0.0
    %818 = vmatpush1.msra.mxu0 0.0
    %819 = vmatprep.subr.mxu0 0.0
    %820 = vmatpush1.msra.mxu0 0.0
    %821 = vmatprep.subr.mxu0 0.0
    %822 = vmatpush1.msra.mxu0 0.0
    %823 = vmatprep.subr.mxu0 0.0
    %824 = vmatpush1.msra.mxu0 0.0
    %825 = vmatprep.subr.mxu0 0.0
    %826 = vmatpush1.msra.mxu0 0.0
    %827 = vmatprep.subr.mxu0 0.0
    %828 = vmatpush1.msra.mxu0 0.0
    %829 = vmatprep.subr.mxu0 0.0
    %830 = vmatpush1.msra.mxu0 0.0
    %831 = vmatprep.subr.mxu0 0.0
    %832 = vmatpush1.msra.mxu0 0.0
    %833 = vmatprep.subr.mxu0 0.0
    %834 = vmatpush1.msra.mxu0 0.0
    %835 = vmatprep.subr.mxu0 0.0
    %836 = vmatpush1.msra.mxu0 0.0
    %837 = vmatprep.subr.mxu0 0.0
    %838 = vmatpush1.msra.mxu0 %v695
    %839 = vmatprep.subr.mxu0 0.0
    %840 = vmatpush1.msra.mxu0 %v694
    %841 = vmatprep.subr.mxu0 0.0
    %842 = vmatpush1.msra.mxu0 %v693
    %843 = vmatprep.subr.mxu0 0.0
    %844 = vmatpush1.msra.mxu0 %v692
    %845 = vmatprep.subr.mxu0 0.0
    %846 = vmatpush1.msra.mxu0 %v691
    %847 = vmatprep.subr.mxu0 0.0
    %848 = vmatpush1.msra.mxu0 %v690
    %849 = vmatprep.subr.mxu0 0.0
    %850 = vmatpush2.msra.mxu0 0.0
    %851 = vmatprep.subr.mxu0 0.0
    %852 = vmatpush2.msra.mxu0 0.0
    %853 = vmatprep.subr.mxu0 0.0
    %854 = vmatpush2.msra.mxu0 0.0
    %855 = vmatprep.subr.mxu0 0.0
    %856 = vmatpush2.msra.mxu0 0.0
    %857 = vmatprep.subr.mxu0 0.0
    %858 = vmatpush2.msra.mxu0 0.0
    %859 = vmatprep.subr.mxu0 0.0
    %860 = vmatpush2.msra.mxu0 0.0
    %861 = vmatprep.subr.mxu0 0.0
    %862 = vmatpush2.msra.mxu0 0.0
    %863 = vmatprep.subr.mxu0 0.0
    %864 = vmatpush2.msra.mxu0 0.0
    %865 = vmatprep.subr.mxu0 0.0
    %866 = vmatpush2.msra.mxu0 0.0
    %867 = vmatprep.subr.mxu0 0.0
    %868 = vmatpush2.msra.mxu0 0.0
    %869 = vmatprep.subr.mxu0 0.0
    %870 = vmatpush2.msra.mxu0 0.0
    %871 = vmatprep.subr.mxu0 0.0
    %872 = vmatpush2.msra.mxu0 0.0
    %873 = vmatprep.subr.mxu0 0.0
    %874 = vmatpush2.msra.mxu0 0.0
    %875 = vmatprep.subr.mxu0 0.0
    %876 = vmatpush2.msra.mxu0 0.0
    %877 = vmatprep.subr.mxu0 0.0
    %878 = vmatpush2.msra.mxu0 0.0
    %879 = vmatprep.subr.mxu0 0.0
    %880 = vmatpush2.msra.mxu0 0.0
    %881 = vmatprep.mubr.f32.mxu0 0.0
    %882 = vmatmul.mubr.f32.gmra.mxu0 %v812
    %v883 = vpop.f32.mrf.mxu0
    %v884 = vadd.f32 0.0, %v883
    %v885 = vpop.f32.mrf.mxu0
    %886 = vmatprep.mubr.f32.mxu0 0.0
    %887 = vmatmul.mubr.f32.gmra.mxu0 %v815
    %v888 = vpop.f32.mrf.mxu0
    %v889 = vadd.f32 0.0, %v888
    %v890 = vpop.f32.mrf.mxu0
    %891 = vdwg.mxu0
    %vm892 = vcmp.gt.f32.partialorder %v884, 0.0
    %vm893 = vcmp.gt.f32.partialorder %v889, 0.0
    %v894 = vmul.f32 %v884, 0.1
    %v895 = vmul.f32 %v889, 0.1
    %v896 = vsel %vm892, %v884, %v894
    %v897 = vsel %vm893, %v889, %v895
    %v899 = vlaneseq
    %v900 = vshrl.u32 %v899, 7
    %v901 = vsub.s32 0, %v900
    %v902 = vrot.slane %v698, %v901
    %v905 = vsel %vm699, %v896, 0
    %v908 = vsel %vm699, %v897, 0
    %910 = vmatprep.subr.mxu0 0.0
    %911 = vmatpush1.msra.mxu0 0.0
    %912 = vmatprep.subr.mxu0 0.0
    %913 = vmatpush1.msra.mxu0 0.0
    %914 = vmatprep.subr.mxu0 0.0
    %915 = vmatpush1.msra.mxu0 0.0
    %916 = vmatprep.subr.mxu0 0.0
    %917 = vmatpush1.msra.mxu0 0.0
    %918 = vmatprep.subr.mxu0 0.0
    %919 = vmatpush1.msra.mxu0 0.0
    %920 = vmatprep.subr.mxu0 0.0
    %921 = vmatpush1.msra.mxu0 0.0
    %922 = vmatprep.subr.mxu0 0.0
    %923 = vmatpush1.msra.mxu0 0.0
    %924 = vmatprep.subr.mxu0 0.0
    %925 = vmatpush1.msra.mxu0 0.0
    %926 = vmatprep.subr.mxu0 0.0
    %927 = vmatpush1.msra.mxu0 0.0
    %928 = vmatprep.subr.mxu0 0.0
    %929 = vmatpush1.msra.mxu0 0.0
    %930 = vmatprep.subr.mxu0 0.0
    %931 = vmatpush1.msra.mxu0 0.0
    %932 = vmatprep.subr.mxu0 0.0
    %933 = vmatpush1.msra.mxu0 0.0
    %934 = vmatprep.subr.mxu0 0.0
    %935 = vmatpush1.msra.mxu0 0.0
    %936 = vmatprep.subr.mxu0 0.0
    %937 = vmatpush1.msra.mxu0 0.0
    %938 = vmatprep.subr.mxu0 0.0
    %939 = vmatpush1.msra.mxu0 %v697
    %940 = vmatprep.subr.mxu0 0.0
    %941 = vmatpush1.msra.mxu0 %v696
    %942 = vmatprep.subr.mxu0 0.0
    %943 = vmatpush2.msra.mxu0 0.0
    %944 = vmatprep.subr.mxu0 0.0
    %945 = vmatpush2.msra.mxu0 0.0
    %946 = vmatprep.subr.mxu0 0.0
    %947 = vmatpush2.msra.mxu0 0.0
    %948 = vmatprep.subr.mxu0 0.0
    %949 = vmatpush2.msra.mxu0 0.0
    %950 = vmatprep.subr.mxu0 0.0
    %951 = vmatpush2.msra.mxu0 0.0
    %952 = vmatprep.subr.mxu0 0.0
    %953 = vmatpush2.msra.mxu0 0.0
    %954 = vmatprep.subr.mxu0 0.0
    %955 = vmatpush2.msra.mxu0 0.0
    %956 = vmatprep.subr.mxu0 0.0
    %957 = vmatpush2.msra.mxu0 0.0
    %958 = vmatprep.subr.mxu0 0.0
    %959 = vmatpush2.msra.mxu0 0.0
    %960 = vmatprep.subr.mxu0 0.0
    %961 = vmatpush2.msra.mxu0 0.0
    %962 = vmatprep.subr.mxu0 0.0
    %963 = vmatpush2.msra.mxu0 0.0
    %964 = vmatprep.subr.mxu0 0.0
    %965 = vmatpush2.msra.mxu0 0.0
    %966 = vmatprep.subr.mxu0 0.0
    %967 = vmatpush2.msra.mxu0 0.0
    %968 = vmatprep.subr.mxu0 0.0
    %969 = vmatpush2.msra.mxu0 0.0
    %970 = vmatprep.subr.mxu0 0.0
    %971 = vmatpush2.msra.mxu0 0.0
    %972 = vmatprep.subr.mxu0 0.0
    %973 = vmatpush2.msra.mxu0 0.0
    %974 = vmatprep.mubr.f32.mxu0 0.0
    %975 = vmatmul.mubr.f32.gmra.mxu0 %v905
    %v976 = vpop.f32.mrf.mxu0
    %v977 = vadd.f32 %v902, %v976
    %v978 = vpop.f32.mrf.mxu0
    %979 = vmatprep.mubr.f32.mxu0 0.0
    %980 = vmatmul.mubr.f32.gmra.mxu0 %v908
    %v981 = vpop.f32.mrf.mxu0
    %v982 = vadd.f32 %v902, %v981
    %v983 = vpop.f32.mrf.mxu0
    %984 = vdwg.mxu0
    %vm985 = vcmp.gt.f32.partialorder %v977, 0.0
    %vm986 = vcmp.gt.f32.partialorder %v982, 0.0
    %v987 = vmul.f32 %v977, 0.1
    %v988 = vmul.f32 %v982, 0.1
    %v989 = vsel %vm985, %v977, %v987
    %v990 = vsel %vm986, %v982, %v988
    %v991 = vsel %vm699, %v378, 0.0
    %v992 = vsel %vm699, %v379, 0.0
    %v993 = vsel %vm79, %v991, 0.0
    %v994 = vsel %vm79, %v992, 0.0
    %997 = vrot.lane.b32.xlu0 %v378, 16
    %v998 = vpop.permute.xlu0 %997
    %999 = vrot.lane.b32.xlu0 %v379, 16
    %v1000 = vpop.permute.xlu0 %999
    %v1003 = vsel %vm699, 0.0, %v998
    %v1004 = vsel %vm699, 0.0, %v1000
    %v1005 = vsel %vm79, %v1003, 0.0
    %v1006 = vsel %vm79, %v1004, 0.0
    %1007 = vrot.lane.b32.xlu0 %v378, 32
    %v1008 = vpop.permute.xlu0 %1007
    %1009 = vrot.lane.b32.xlu0 %v379, 32
    %v1010 = vpop.permute.xlu0 %1009
    %v1013 = vsel %vm79, 0.0, %v1008
    %v1014 = vsel %vm79, 0.0, %v1010
    %1015 = vmatprep.subr.mxu0 0.0
    %1016 = vmatpush1.msra.mxu0 0.0
    %1017 = vmatprep.subr.mxu0 0.0
    %1018 = vmatpush1.msra.mxu0 0.0
    %1019 = vmatprep.subr.mxu0 0.0
    %1020 = vmatpush1.msra.mxu0 0.0
    %1021 = vmatprep.subr.mxu0 0.0
    %1022 = vmatpush1.msra.mxu0 0.0
    %1023 = vmatprep.subr.mxu0 0.0
    %1024 = vmatpush1.msra.mxu0 0.0
    %1025 = vmatprep.subr.mxu0 0.0
    %1026 = vmatpush1.msra.mxu0 0.0
    %1027 = vmatprep.subr.mxu0 0.0
    %1028 = vmatpush1.msra.mxu0 0.0
    %1029 = vmatprep.subr.mxu0 0.0
    %1030 = vmatpush1.msra.mxu0 0.0
    %1031 = vmatprep.subr.mxu0 0.0
    %1032 = vmatpush1.msra.mxu0 0.0
    %1033 = vmatprep.subr.mxu0 0.0
    %1034 = vmatpush1.msra.mxu0 0.0
    %1035 = vmatprep.subr.mxu0 0.0
    %1036 = vmatpush1.msra.mxu0 %v1014
    %1037 = vmatprep.subr.mxu0 0.0
    %1038 = vmatpush1.msra.mxu0 %v1013
    %1039 = vmatprep.subr.mxu0 0.0
    %1040 = vmatpush1.msra.mxu0 %v1006
    %1041 = vmatprep.subr.mxu0 0.0
    %1042 = vmatpush1.msra.mxu0 %v1005
    %1043 = vmatprep.subr.mxu0 0.0
    %1044 = vmatpush1.msra.mxu0 %v994
    %1045 = vmatprep.subr.mxu0 0.0
    %1046 = vmatpush1.msra.mxu0 %v993
    %1047 = vmatprep.subr.mxu0 0.0
    %1048 = vmatpush2.msra.mxu0 0.0
    %1049 = vmatprep.subr.mxu0 0.0
    %1050 = vmatpush2.msra.mxu0 0.0
    %1051 = vmatprep.subr.mxu0 0.0
    %1052 = vmatpush2.msra.mxu0 0.0
    %1053 = vmatprep.subr.mxu0 0.0
    %1054 = vmatpush2.msra.mxu0 0.0
    %1055 = vmatprep.subr.mxu0 0.0
    %1056 = vmatpush2.msra.mxu0 0.0
    %1057 = vmatprep.subr.mxu0 0.0
    %1058 = vmatpush2.msra.mxu0 0.0
    %1059 = vmatprep.subr.mxu0 0.0
    %1060 = vmatpush2.msra.mxu0 0.0
    %1061 = vmatprep.subr.mxu0 0.0
    %1062 = vmatpush2.msra.mxu0 0.0
    %1063 = vmatprep.subr.mxu0 0.0
    %1064 = vmatpush2.msra.mxu0 0.0
    %1065 = vmatprep.subr.mxu0 0.0
    %1066 = vmatpush2.msra.mxu0 0.0
    %1067 = vmatprep.subr.mxu0 0.0
    %1068 = vmatpush2.msra.mxu0 0.0
    %1069 = vmatprep.subr.mxu0 0.0
    %1070 = vmatpush2.msra.mxu0 0.0
    %1071 = vmatprep.subr.mxu0 0.0
    %1072 = vmatpush2.msra.mxu0 0.0
    %1073 = vmatprep.subr.mxu0 0.0
    %1074 = vmatpush2.msra.mxu0 0.0
    %1075 = vmatprep.subr.mxu0 0.0
    %1076 = vmatpush2.msra.mxu0 0.0
    %1077 = vmatprep.subr.mxu0 0.0
    %1078 = vmatpush2.msra.mxu0 0.0
    %1079 = vmatprep.mubr.f32.mxu0 0.0
    %1080 = vmatmul.mubr.f32.gmra.mxu0 %v406
    %v1081 = vpop.f32.mrf.mxu0
    %v1082 = vadd.f32 0.0, %v1081
    %v1083 = vpop.f32.mrf.mxu0
    %1084 = vmatprep.mubr.f32.mxu0 0.0
    %1085 = vmatmul.mubr.f32.gmra.mxu0 %v409
    %v1086 = vpop.f32.mrf.mxu0
    %v1087 = vadd.f32 0.0, %v1086
    %v1088 = vpop.f32.mrf.mxu0
    %1089 = vmatprep.mubr.f32.mxu0 0.0
    %1090 = vmatmul.mubr.f32.gmra.mxu0 %v412
    %v1091 = vpop.f32.mrf.mxu0
    %v1092 = vadd.f32 0.0, %v1091
    %v1093 = vpop.f32.mrf.mxu0
    %1094 = vdwg.mxu0
    %v1096 = vsel %vm404, %v1082, 0
    %v1099 = vsel %vm404, %v1087, 0
    %v1102 = vsel %vm404, %v1092, 0
    %1104 = vmatprep.subr.mxu0 0.0
    %1105 = vmatpush1.msra.mxu0 0.0
    %1106 = vmatprep.subr.mxu0 0.0
    %1107 = vmatpush1.msra.mxu0 0.0
    %1108 = vmatprep.subr.mxu0 0.0
    %1109 = vmatpush1.msra.mxu0 0.0
    %1110 = vmatprep.subr.mxu0 0.0
    %1111 = vmatpush1.msra.mxu0 0.0
    %1112 = vmatprep.subr.mxu0 0.0
    %1113 = vmatpush1.msra.mxu0 0.0
    %1114 = vmatprep.subr.mxu0 0.0
    %1115 = vmatpush1.msra.mxu0 0.0
    %1116 = vmatprep.subr.mxu0 0.0
    %1117 = vmatpush1.msra.mxu0 0.0
    %1118 = vmatprep.subr.mxu0 0.0
    %1119 = vmatpush1.msra.mxu0 0.0
    %1120 = vmatprep.subr.mxu0 0.0
    %1121 = vmatpush1.msra.mxu0 0.0
    %1122 = vmatprep.subr.mxu0 0.0
    %1123 = vmatpush1.msra.mxu0 0.0
    %1124 = vmatprep.subr.mxu0 0.0
    %1125 = vmatpush1.msra.mxu0 %v695
    %1126 = vmatprep.subr.mxu0 0.0
    %1127 = vmatpush1.msra.mxu0 %v694
    %1128 = vmatprep.subr.mxu0 0.0
    %1129 = vmatpush1.msra.mxu0 %v693
    %1130 = vmatprep.subr.mxu0 0.0
    %1131 = vmatpush1.msra.mxu0 %v692
    %1132 = vmatprep.subr.mxu0 0.0
    %1133 = vmatpush1.msra.mxu0 %v691
    %1134 = vmatprep.subr.mxu0 0.0
    %1135 = vmatpush1.msra.mxu0 %v690
    %1136 = vmatprep.subr.mxu0 0.0
    %1137 = vmatpush2.msra.mxu0 0.0
    %1138 = vmatprep.subr.mxu0 0.0
    %1139 = vmatpush2.msra.mxu0 0.0
    %1140 = vmatprep.subr.mxu0 0.0
    %1141 = vmatpush2.msra.mxu0 0.0
    %1142 = vmatprep.subr.mxu0 0.0
    %1143 = vmatpush2.msra.mxu0 0.0
    %1144 = vmatprep.subr.mxu0 0.0
    %1145 = vmatpush2.msra.mxu0 0.0
    %1146 = vmatprep.subr.mxu0 0.0
    %1147 = vmatpush2.msra.mxu0 0.0
    %1148 = vmatprep.subr.mxu0 0.0
    %1149 = vmatpush2.msra.mxu0 0.0
    %1150 = vmatprep.subr.mxu0 0.0
    %1151 = vmatpush2.msra.mxu0 0.0
    %1152 = vmatprep.subr.mxu0 0.0
    %1153 = vmatpush2.msra.mxu0 0.0
    %1154 = vmatprep.subr.mxu0 0.0
    %1155 = vmatpush2.msra.mxu0 0.0
    %1156 = vmatprep.subr.mxu0 0.0
    %1157 = vmatpush2.msra.mxu0 0.0
    %1158 = vmatprep.subr.mxu0 0.0
    %1159 = vmatpush2.msra.mxu0 0.0
    %1160 = vmatprep.subr.mxu0 0.0
    %1161 = vmatpush2.msra.mxu0 0.0
    %1162 = vmatprep.subr.mxu0 0.0
    %1163 = vmatpush2.msra.mxu0 0.0
    %1164 = vmatprep.subr.mxu0 0.0
    %1165 = vmatpush2.msra.mxu0 0.0
    %1166 = vmatprep.subr.mxu0 0.0
    %1167 = vmatpush2.msra.mxu0 0.0
    %1168 = vmatprep.mubr.f32.mxu0 0.0
    %1169 = vmatmul.mubr.f32.gmra.mxu0 %v1096
    %v1170 = vpop.f32.mrf.mxu0
    %v1171 = vadd.f32 0.0, %v1170
    %v1172 = vpop.f32.mrf.mxu0
    %1173 = vmatprep.mubr.f32.mxu0 0.0
    %1174 = vmatmul.mubr.f32.gmra.mxu0 %v1099
    %v1175 = vpop.f32.mrf.mxu0
    %v1176 = vadd.f32 0.0, %v1175
    %v1177 = vpop.f32.mrf.mxu0
    %1178 = vmatprep.mubr.f32.mxu0 0.0
    %1179 = vmatmul.mubr.f32.gmra.mxu0 %v1102
    %v1180 = vpop.f32.mrf.mxu0
    %v1181 = vadd.f32 0.0, %v1180
    %v1182 = vpop.f32.mrf.mxu0
    %1183 = vdwg.mxu0
    %vm1184 = vcmp.gt.f32.partialorder %v1171, 0.0
    %vm1185 = vcmp.gt.f32.partialorder %v1176, 0.0
    %vm1186 = vcmp.gt.f32.partialorder %v1181, 0.0
    %v1187 = vmul.f32 %v1171, 0.1
    %v1188 = vmul.f32 %v1176, 0.1
    %v1189 = vmul.f32 %v1181, 0.1
    %v1190 = vsel %vm1184, %v1171, %v1187
    %v1191 = vsel %vm1185, %v1176, %v1188
    %v1192 = vsel %vm1186, %v1181, %v1189
    %v1194 = vsel %vm699, %v1190, 0
    %v1197 = vsel %vm699, %v1191, 0
    %v1200 = vsel %vm699, %v1192, 0
    %1202 = vmatprep.subr.mxu0 0.0
    %1203 = vmatpush1.msra.mxu0 0.0
    %1204 = vmatprep.subr.mxu0 0.0
    %1205 = vmatpush1.msra.mxu0 0.0
    %1206 = vmatprep.subr.mxu0 0.0
    %1207 = vmatpush1.msra.mxu0 0.0
    %1208 = vmatprep.subr.mxu0 0.0
    %1209 = vmatpush1.msra.mxu0 0.0
    %1210 = vmatprep.subr.mxu0 0.0
    %1211 = vmatpush1.msra.mxu0 0.0
    %1212 = vmatprep.subr.mxu0 0.0
    %1213 = vmatpush1.msra.mxu0 0.0
    %1214 = vmatprep.subr.mxu0 0.0
    %1215 = vmatpush1.msra.mxu0 0.0
    %1216 = vmatprep.subr.mxu0 0.0
    %1217 = vmatpush1.msra.mxu0 0.0
    %1218 = vmatprep.subr.mxu0 0.0
    %1219 = vmatpush1.msra.mxu0 0.0
    %1220 = vmatprep.subr.mxu0 0.0
    %1221 = vmatpush1.msra.mxu0 0.0
    %1222 = vmatprep.subr.mxu0 0.0
    %1223 = vmatpush1.msra.mxu0 0.0
    %1224 = vmatprep.subr.mxu0 0.0
    %1225 = vmatpush1.msra.mxu0 0.0
    %1226 = vmatprep.subr.mxu0 0.0
    %1227 = vmatpush1.msra.mxu0 0.0
    %1228 = vmatprep.subr.mxu0 0.0
    %1229 = vmatpush1.msra.mxu0 0.0
    %1230 = vmatprep.subr.mxu0 0.0
    %1231 = vmatpush1.msra.mxu0 %v697
    %1232 = vmatprep.subr.mxu0 0.0
    %1233 = vmatpush1.msra.mxu0 %v696
    %1234 = vmatprep.subr.mxu0 0.0
    %1235 = vmatpush2.msra.mxu0 0.0
    %1236 = vmatprep.subr.mxu0 0.0
    %1237 = vmatpush2.msra.mxu0 0.0
    %1238 = vmatprep.subr.mxu0 0.0
    %1239 = vmatpush2.msra.mxu0 0.0
    %1240 = vmatprep.subr.mxu0 0.0
    %1241 = vmatpush2.msra.mxu0 0.0
    %1242 = vmatprep.subr.mxu0 0.0
    %1243 = vmatpush2.msra.mxu0 0.0
    %1244 = vmatprep.subr.mxu0 0.0
    %1245 = vmatpush2.msra.mxu0 0.0
    %1246 = vmatprep.subr.mxu0 0.0
    %1247 = vmatpush2.msra.mxu0 0.0
    %1248 = vmatprep.subr.mxu0 0.0
    %1249 = vmatpush2.msra.mxu0 0.0
    %1250 = vmatprep.subr.mxu0 0.0
    %1251 = vmatpush2.msra.mxu0 0.0
    %1252 = vmatprep.subr.mxu0 0.0
    %1253 = vmatpush2.msra.mxu0 0.0
    %1254 = vmatprep.subr.mxu0 0.0
    %1255 = vmatpush2.msra.mxu0 0.0
    %1256 = vmatprep.subr.mxu0 0.0
    %1257 = vmatpush2.msra.mxu0 0.0
    %1258 = vmatprep.subr.mxu0 0.0
    %1259 = vmatpush2.msra.mxu0 0.0
    %1260 = vmatprep.subr.mxu0 0.0
    %1261 = vmatpush2.msra.mxu0 0.0
    %1262 = vmatprep.subr.mxu0 0.0
    %1263 = vmatpush2.msra.mxu0 0.0
    %1264 = vmatprep.subr.mxu0 0.0
    %1265 = vmatpush2.msra.mxu0 0.0
    %1266 = vmatprep.mubr.f32.mxu0 0.0
    %1267 = vmatmul.mubr.f32.gmra.mxu0 %v1194
    %v1268 = vpop.f32.mrf.mxu0
    %v1269 = vadd.f32 %v902, %v1268
    %v1270 = vpop.f32.mrf.mxu0
    %1271 = vmatprep.mubr.f32.mxu0 0.0
    %1272 = vmatmul.mubr.f32.gmra.mxu0 %v1197
    %v1273 = vpop.f32.mrf.mxu0
    %v1274 = vadd.f32 %v902, %v1273
    %v1275 = vpop.f32.mrf.mxu0
    %1276 = vmatprep.mubr.f32.mxu0 0.0
    %1277 = vmatmul.mubr.f32.gmra.mxu0 %v1200
    %v1278 = vpop.f32.mrf.mxu0
    %v1279 = vadd.f32 %v902, %v1278
    %v1280 = vpop.f32.mrf.mxu0
    %1281 = vdwg.mxu0
    %vm1282 = vcmp.gt.f32.partialorder %v1269, 0.0
    %vm1283 = vcmp.gt.f32.partialorder %v1274, 0.0
    %vm1284 = vcmp.gt.f32.partialorder %v1279, 0.0
    %v1285 = vmul.f32 %v1269, 0.1
    %v1286 = vmul.f32 %v1274, 0.1
    %v1287 = vmul.f32 %v1279, 0.1
    %v1288 = vsel %vm1282, %v1269, %v1285
    %v1289 = vsel %vm1283, %v1274, %v1286
    %v1290 = vsel %vm1284, %v1279, %v1287
    %v1291 = vmul.f32 %v989, 0.5
    %v1292 = vmul.f32 %v990, 0.5
    %v1293 = vadd.f32 %v378, %v1291
    %v1294 = vadd.f32 %v379, %v1292
    %v1295 = vmul.f32 %v1288, 0.5
    %v1296 = vmul.f32 %v1289, 0.5
    %v1297 = vmul.f32 %v1290, 0.5
    %v1298 = vadd.f32 %v687, %v1295
    %v1299 = vadd.f32 %v688, %v1296
    %v1300 = vadd.f32 %v689, %v1297
    %1301 = vst.msk [vmem:[#allocation2] sm:$0xff] %vm699, %v1293
    %1302 = vst.msk [vmem:[#allocation2 + $0x8] sm:$0xff] %vm699, %v1294
    %1303 = vst.msk [vmem:[%s15] sm:$0xff] %vm699, %v1298
    %1304 = vst.msk [vmem:[%s15 + $0x8] sm:$0xff] %vm699, %v1299
    %1305 = vst.msk [vmem:[%s15 + $0x10] sm:$0xff] %vm699, %v1300
    %v1306 = vld [vmem:[%s10] sm:$0xff]
    %v1307 = vld [vmem:[%s10 + $0x8] sm:$0xff]
    %v1308 = vld [vmem:[%s10 + $0x10] sm:$0xff]
    %v1309 = vld [vmem:[%s10 + $0x18] sm:$0xff]
    %v1310 = vld [vmem:[%s10 + $0x20] sm:$0xff]
    %v1312 = vsel %vm699, %v1306, 0
    %v1315 = vsel %vm699, %v1307, 0
    %v1318 = vsel %vm699, %v1308, 0
    %v1321 = vsel %vm699, %v1309, 0
    %v1324 = vsel %vm699, %v1310, 0
    %1326 = vmatprep.subr.mxu0 0.0
    %1327 = vmatpush1.msra.mxu0 0.0
    %1328 = vmatprep.subr.mxu0 0.0
    %1329 = vmatpush1.msra.mxu0 0.0
    %1330 = vmatprep.subr.mxu0 0.0
    %1331 = vmatpush1.msra.mxu0 0.0
    %1332 = vmatprep.subr.mxu0 0.0
    %1333 = vmatpush1.msra.mxu0 0.0
    %1334 = vmatprep.subr.mxu0 0.0
    %1335 = vmatpush1.msra.mxu0 0.0
    %1336 = vmatprep.subr.mxu0 0.0
    %1337 = vmatpush1.msra.mxu0 0.0
    %1338 = vmatprep.subr.mxu0 0.0
    %1339 = vmatpush1.msra.mxu0 0.0
    %1340 = vmatprep.subr.mxu0 0.0
    %1341 = vmatpush1.msra.mxu0 0.0
    %1342 = vmatprep.subr.mxu0 0.0
    %1343 = vmatpush1.msra.mxu0 0.0
    %1344 = vmatprep.subr.mxu0 0.0
    %1345 = vmatpush1.msra.mxu0 0.0
    %1346 = vmatprep.subr.mxu0 0.0
    %1347 = vmatpush1.msra.mxu0 0.0
    %1348 = vmatprep.subr.mxu0 0.0
    %1349 = vmatpush1.msra.mxu0 0.0
    %1350 = vmatprep.subr.mxu0 0.0
    %1351 = vmatpush1.msra.mxu0 0.0
    %1352 = vmatprep.subr.mxu0 0.0
    %1353 = vmatpush1.msra.mxu0 0.0
    %1354 = vmatprep.subr.mxu0 0.0
    %1355 = vmatpush1.msra.mxu0 %v1294
    %1356 = vmatprep.subr.mxu0 0.0
    %1357 = vmatpush1.msra.mxu0 %v1293
    %1358 = vmatprep.subr.mxu0 0.0
    %1359 = vmatpush2.msra.mxu0 0.0
    %1360 = vmatprep.subr.mxu0 0.0
    %1361 = vmatpush2.msra.mxu0 0.0
    %1362 = vmatprep.subr.mxu0 0.0
    %1363 = vmatpush2.msra.mxu0 0.0
    %1364 = vmatprep.subr.mxu0 0.0
    %1365 = vmatpush2.msra.mxu0 0.0
    %1366 = vmatprep.subr.mxu0 0.0
    %1367 = vmatpush2.msra.mxu0 0.0
    %1368 = vmatprep.subr.mxu0 0.0
    %1369 = vmatpush2.msra.mxu0 0.0
    %1370 = vmatprep.subr.mxu0 0.0
    %1371 = vmatpush2.msra.mxu0 0.0
    %1372 = vmatprep.subr.mxu0 0.0
    %1373 = vmatpush2.msra.mxu0 0.0
    %1374 = vmatprep.subr.mxu0 0.0
    %1375 = vmatpush2.msra.mxu0 0.0
    %1376 = vmatprep.subr.mxu0 0.0
    %1377 = vmatpush2.msra.mxu0 0.0
    %1378 = vmatprep.subr.mxu0 0.0
    %1379 = vmatpush2.msra.mxu0 0.0
    %1380 = vmatprep.subr.mxu0 0.0
    %1381 = vmatpush2.msra.mxu0 0.0
    %1382 = vmatprep.subr.mxu0 0.0
    %1383 = vmatpush2.msra.mxu0 0.0
    %1384 = vmatprep.subr.mxu0 0.0
    %1385 = vmatpush2.msra.mxu0 0.0
    %1386 = vmatprep.subr.mxu0 0.0
    %1387 = vmatpush2.msra.mxu0 0.0
    %1388 = vmatprep.subr.mxu0 0.0
    %1389 = vmatpush2.msra.mxu0 0.0
    %1390 = vmatprep.mubr.f32.mxu0 0.0
    %1391 = vmatmul.mubr.f32.gmra.mxu0 %v1312
    %v1392 = vpop.f32.mrf.mxu0
    %v1393 = vadd.f32 0.0, %v1392
    %v1394 = vpop.f32.mrf.mxu0
    %1395 = vmatprep.mubr.f32.mxu0 0.0
    %1396 = vmatmul.mubr.f32.gmra.mxu0 %v1315
    %v1397 = vpop.f32.mrf.mxu0
    %v1398 = vadd.f32 0.0, %v1397
    %v1399 = vpop.f32.mrf.mxu0
    %1400 = vmatprep.mubr.f32.mxu0 0.0
    %1401 = vmatmul.mubr.f32.gmra.mxu0 %v1318
    %v1402 = vpop.f32.mrf.mxu0
    %v1403 = vadd.f32 0.0, %v1402
    %v1404 = vpop.f32.mrf.mxu0
    %1405 = vmatprep.mubr.f32.mxu0 0.0
    %1406 = vmatmul.mubr.f32.gmra.mxu0 %v1321
    %v1407 = vpop.f32.mrf.mxu0
    %v1408 = vadd.f32 0.0, %v1407
    %v1409 = vpop.f32.mrf.mxu0
    %1410 = vmatprep.mubr.f32.mxu0 0.0
    %1411 = vmatmul.mubr.f32.gmra.mxu0 %v1324
    %v1412 = vpop.f32.mrf.mxu0
    %v1413 = vadd.f32 0.0, %v1412
    %v1414 = vpop.f32.mrf.mxu0
    %1415 = vdwg.mxu0
    %v1416 = vld [vmem:[%s11] sm:$0xff]
    %v1417 = vld [vmem:[%s11 + $0x8] sm:$0xff]
    %v1418 = vld [vmem:[%s11 + $0x10] sm:$0xff]
    %v1419 = vld [vmem:[%s11 + $0x18] sm:$0xff]
    %v1420 = vld [vmem:[%s11 + $0x20] sm:$0xff]
    %vm1421 = vcmask 195584
    %v1423 = vsel %vm1421, %v1416, 0
    %v1426 = vsel %vm1421, %v1417, 0
    %v1429 = vsel %vm1421, %v1418, 0
    %v1432 = vsel %vm1421, %v1419, 0
    %v1435 = vsel %vm1421, %v1420, 0
    %1437 = vmatprep.subr.mxu0 0.0
    %1438 = vmatpush1.msra.mxu0 0.0
    %1439 = vmatprep.subr.mxu0 0.0
    %1440 = vmatpush1.msra.mxu0 0.0
    %1441 = vmatprep.subr.mxu0 0.0
    %1442 = vmatpush1.msra.mxu0 0.0
    %1443 = vmatprep.subr.mxu0 0.0
    %1444 = vmatpush1.msra.mxu0 0.0
    %1445 = vmatprep.subr.mxu0 0.0
    %1446 = vmatpush1.msra.mxu0 0.0
    %1447 = vmatprep.subr.mxu0 0.0
    %1448 = vmatpush1.msra.mxu0 0.0
    %1449 = vmatprep.subr.mxu0 0.0
    %1450 = vmatpush1.msra.mxu0 0.0
    %1451 = vmatprep.subr.mxu0 0.0
    %1452 = vmatpush1.msra.mxu0 0.0
    %1453 = vmatprep.subr.mxu0 0.0
    %1454 = vmatpush1.msra.mxu0 0.0
    %1455 = vmatprep.subr.mxu0 0.0
    %1456 = vmatpush1.msra.mxu0 0.0
    %1457 = vmatprep.subr.mxu0 0.0
    %1458 = vmatpush1.msra.mxu0 0.0
    %1459 = vmatprep.subr.mxu0 0.0
    %1460 = vmatpush1.msra.mxu0 0.0
    %1461 = vmatprep.subr.mxu0 0.0
    %1462 = vmatpush1.msra.mxu0 0.0
    %1463 = vmatprep.subr.mxu0 0.0
    %1464 = vmatpush1.msra.mxu0 %v1300
    %1465 = vmatprep.subr.mxu0 0.0
    %1466 = vmatpush1.msra.mxu0 %v1299
    %1467 = vmatprep.subr.mxu0 0.0
    %1468 = vmatpush1.msra.mxu0 %v1298
    %1469 = vmatprep.subr.mxu0 0.0
    %1470 = vmatpush2.msra.mxu0 0.0
    %1471 = vmatprep.subr.mxu0 0.0
    %1472 = vmatpush2.msra.mxu0 0.0
    %1473 = vmatprep.subr.mxu0 0.0
    %1474 = vmatpush2.msra.mxu0 0.0
    %1475 = vmatprep.subr.mxu0 0.0
    %1476 = vmatpush2.msra.mxu0 0.0
    %1477 = vmatprep.subr.mxu0 0.0
    %1478 = vmatpush2.msra.mxu0 0.0
    %1479 = vmatprep.subr.mxu0 0.0
    %1480 = vmatpush2.msra.mxu0 0.0
    %1481 = vmatprep.subr.mxu0 0.0
    %1482 = vmatpush2.msra.mxu0 0.0
    %1483 = vmatprep.subr.mxu0 0.0
    %1484 = vmatpush2.msra.mxu0 0.0
    %1485 = vmatprep.subr.mxu0 0.0
    %1486 = vmatpush2.msra.mxu0 0.0
    %1487 = vmatprep.subr.mxu0 0.0
    %1488 = vmatpush2.msra.mxu0 0.0
    %1489 = vmatprep.subr.mxu0 0.0
    %1490 = vmatpush2.msra.mxu0 0.0
    %1491 = vmatprep.subr.mxu0 0.0
    %1492 = vmatpush2.msra.mxu0 0.0
    %1493 = vmatprep.subr.mxu0 0.0
    %1494 = vmatpush2.msra.mxu0 0.0
    %1495 = vmatprep.subr.mxu0 0.0
    %1496 = vmatpush2.msra.mxu0 0.0
    %1497 = vmatprep.subr.mxu0 0.0
    %1498 = vmatpush2.msra.mxu0 0.0
    %1499 = vmatprep.subr.mxu0 0.0
    %1500 = vmatpush2.msra.mxu0 0.0
    %1501 = vmatprep.mubr.f32.mxu0 0.0
    %1502 = vmatmul.mubr.f32.gmra.mxu0 %v1423
    %v1503 = vpop.f32.mrf.mxu0
    %v1504 = vadd.f32 0.0, %v1503
    %v1505 = vpop.f32.mrf.mxu0
    %1506 = vmatprep.mubr.f32.mxu0 0.0
    %1507 = vmatmul.mubr.f32.gmra.mxu0 %v1426
    %v1508 = vpop.f32.mrf.mxu0
    %v1509 = vadd.f32 0.0, %v1508
    %v1510 = vpop.f32.mrf.mxu0
    %1511 = vmatprep.mubr.f32.mxu0 0.0
    %1512 = vmatmul.mubr.f32.gmra.mxu0 %v1429
    %v1513 = vpop.f32.mrf.mxu0
    %v1514 = vadd.f32 0.0, %v1513
    %v1515 = vpop.f32.mrf.mxu0
    %1516 = vmatprep.mubr.f32.mxu0 0.0
    %1517 = vmatmul.mubr.f32.gmra.mxu0 %v1432
    %v1518 = vpop.f32.mrf.mxu0
    %v1519 = vadd.f32 0.0, %v1518
    %v1520 = vpop.f32.mrf.mxu0
    %1521 = vmatprep.mubr.f32.mxu0 0.0
    %1522 = vmatmul.mubr.f32.gmra.mxu0 %v1435
    %v1523 = vpop.f32.mrf.mxu0
    %v1524 = vadd.f32 0.0, %v1523
    %v1525 = vpop.f32.mrf.mxu0
    %1526 = vdwg.mxu0
    %v1527 = vld [vmem:[%s12] sm:$0xff]
    %v1528 = vld [vmem:[%s12 + $0x8] sm:$0xff]
    %v1530 = vsel %vm699, %v1393, 0
    %v1533 = vsel %vm699, %v1398, 0
    %v1536 = vsel %vm699, %v1403, 0
    %v1539 = vsel %vm699, %v1408, 0
    %v1542 = vsel %vm699, %v1413, 0
    %1544 = vmatprep.subr.mxu0 0.0
    %1545 = vmatpush1.msra.mxu0 0.0
    %1546 = vmatprep.subr.mxu0 0.0
    %1547 = vmatpush1.msra.mxu0 0.0
    %1548 = vmatprep.subr.mxu0 0.0
    %1549 = vmatpush1.msra.mxu0 0.0
    %1550 = vmatprep.subr.mxu0 0.0
    %1551 = vmatpush1.msra.mxu0 0.0
    %1552 = vmatprep.subr.mxu0 0.0
    %1553 = vmatpush1.msra.mxu0 0.0
    %1554 = vmatprep.subr.mxu0 0.0
    %1555 = vmatpush1.msra.mxu0 0.0
    %1556 = vmatprep.subr.mxu0 0.0
    %1557 = vmatpush1.msra.mxu0 0.0
    %1558 = vmatprep.subr.mxu0 0.0
    %1559 = vmatpush1.msra.mxu0 0.0
    %1560 = vmatprep.subr.mxu0 0.0
    %1561 = vmatpush1.msra.mxu0 0.0
    %1562 = vmatprep.subr.mxu0 0.0
    %1563 = vmatpush1.msra.mxu0 0.0
    %1564 = vmatprep.subr.mxu0 0.0
    %1565 = vmatpush1.msra.mxu0 0.0
    %1566 = vmatprep.subr.mxu0 0.0
    %1567 = vmatpush1.msra.mxu0 0.0
    %1568 = vmatprep.subr.mxu0 0.0
    %1569 = vmatpush1.msra.mxu0 0.0
    %1570 = vmatprep.subr.mxu0 0.0
    %1571 = vmatpush1.msra.mxu0 0.0
    %1572 = vmatprep.subr.mxu0 0.0
    %1573 = vmatpush1.msra.mxu0 %v1528
    %1574 = vmatprep.subr.mxu0 0.0
    %1575 = vmatpush1.msra.mxu0 %v1527
    %1576 = vmatprep.subr.mxu0 0.0
    %1577 = vmatpush2.msra.mxu0 0.0
    %1578 = vmatprep.subr.mxu0 0.0
    %1579 = vmatpush2.msra.mxu0 0.0
    %1580 = vmatprep.subr.mxu0 0.0
    %1581 = vmatpush2.msra.mxu0 0.0
    %1582 = vmatprep.subr.mxu0 0.0
    %1583 = vmatpush2.msra.mxu0 0.0
    %1584 = vmatprep.subr.mxu0 0.0
    %1585 = vmatpush2.msra.mxu0 0.0
    %1586 = vmatprep.subr.mxu0 0.0
    %1587 = vmatpush2.msra.mxu0 0.0
    %1588 = vmatprep.subr.mxu0 0.0
    %1589 = vmatpush2.msra.mxu0 0.0
    %1590 = vmatprep.subr.mxu0 0.0
    %1591 = vmatpush2.msra.mxu0 0.0
    %1592 = vmatprep.subr.mxu0 0.0
    %1593 = vmatpush2.msra.mxu0 0.0
    %1594 = vmatprep.subr.mxu0 0.0
    %1595 = vmatpush2.msra.mxu0 0.0
    %1596 = vmatprep.subr.mxu0 0.0
    %1597 = vmatpush2.msra.mxu0 0.0
    %1598 = vmatprep.subr.mxu0 0.0
    %1599 = vmatpush2.msra.mxu0 0.0
    %1600 = vmatprep.subr.mxu0 0.0
    %1601 = vmatpush2.msra.mxu0 0.0
    %1602 = vmatprep.subr.mxu0 0.0
    %1603 = vmatpush2.msra.mxu0 0.0
    %1604 = vmatprep.subr.mxu0 0.0
    %1605 = vmatpush2.msra.mxu0 0.0
    %1606 = vmatprep.subr.mxu0 0.0
    %1607 = vmatpush2.msra.mxu0 0.0
    %1608 = vmatprep.mubr.f32.mxu0 0.0
    %1609 = vmatmul.mubr.f32.gmra.mxu0 %v1530
    %v1610 = vpop.f32.mrf.mxu0
    %v1611 = vadd.f32 0.0, %v1610
    %v1612 = vpop.f32.mrf.mxu0
    %1613 = vmatprep.mubr.f32.mxu0 0.0
    %1614 = vmatmul.mubr.f32.gmra.mxu0 %v1533
    %v1615 = vpop.f32.mrf.mxu0
    %v1616 = vadd.f32 0.0, %v1615
    %v1617 = vpop.f32.mrf.mxu0
    %1618 = vmatprep.mubr.f32.mxu0 0.0
    %1619 = vmatmul.mubr.f32.gmra.mxu0 %v1536
    %v1620 = vpop.f32.mrf.mxu0
    %v1621 = vadd.f32 0.0, %v1620
    %v1622 = vpop.f32.mrf.mxu0
    %1623 = vmatprep.mubr.f32.mxu0 0.0
    %1624 = vmatmul.mubr.f32.gmra.mxu0 %v1539
    %v1625 = vpop.f32.mrf.mxu0
    %v1626 = vadd.f32 0.0, %v1625
    %v1627 = vpop.f32.mrf.mxu0
    %1628 = vmatprep.mubr.f32.mxu0 0.0
    %1629 = vmatmul.mubr.f32.gmra.mxu0 %v1542
    %v1630 = vpop.f32.mrf.mxu0
    %v1631 = vadd.f32 0.0, %v1630
    %v1632 = vpop.f32.mrf.mxu0
    %1633 = vdwg.mxu0
    %v1634 = vmul.f32 %v1611, %v1504
    %v1635 = vmul.f32 %v1616, %v1509
    %v1636 = vmul.f32 %v1621, %v1514
    %v1637 = vmul.f32 %v1626, %v1519
    %v1638 = vmul.f32 %v1631, %v1524
    %v1639 = vsel %vm699, %v1634, 0.0
    %1640 = vadd.xlane.f32.xlu0 %v1639
    %v1641 = vpop.xlane.xlu0 %1640
    %v1642 = vsel %vm699, %v1635, 0.0
    %1643 = vadd.xlane.f32.xlu0 %v1642
    %v1644 = vpop.xlane.xlu0 %1643
    %v1645 = vsel %vm699, %v1636, 0.0
    %1646 = vadd.xlane.f32.xlu0 %v1645
    %v1647 = vpop.xlane.xlu0 %1646
    %v1648 = vsel %vm699, %v1637, 0.0
    %1649 = vadd.xlane.f32.xlu0 %v1648
    %v1650 = vpop.xlane.xlu0 %1649
    %v1651 = vsel %vm699, %v1638, 0.0
    %1652 = vadd.xlane.f32.xlu0 %v1651
    %v1653 = vpop.xlane.xlu0 %1652
    %1659 = vrot.lane.b32.xlu0 %v1504, 16
    %v1660 = vpop.permute.xlu0 %1659
    %1661 = vrot.lane.b32.xlu0 %v1509, 16
    %v1662 = vpop.permute.xlu0 %1661
    %1663 = vrot.lane.b32.xlu0 %v1514, 16
    %v1664 = vpop.permute.xlu0 %1663
    %1665 = vrot.lane.b32.xlu0 %v1519, 16
    %v1666 = vpop.permute.xlu0 %1665
    %1667 = vrot.lane.b32.xlu0 %v1524, 16
    %v1668 = vpop.permute.xlu0 %1667
    %v1674 = vmul.f32 %v1611, %v1660
    %v1675 = vmul.f32 %v1616, %v1662
    %v1676 = vmul.f32 %v1621, %v1664
    %v1677 = vmul.f32 %v1626, %v1666
    %v1678 = vmul.f32 %v1631, %v1668
    %1684 = vrot.lane.b32.xlu0 %v1674, 112
    %v1685 = vpop.permute.xlu0 %1684
    %1686 = vrot.lane.b32.xlu0 %v1675, 112
    %v1687 = vpop.permute.xlu0 %1686
    %1688 = vrot.lane.b32.xlu0 %v1676, 112
    %v1689 = vpop.permute.xlu0 %1688
    %1690 = vrot.lane.b32.xlu0 %v1677, 112
    %v1691 = vpop.permute.xlu0 %1690
    %1692 = vrot.lane.b32.xlu0 %v1678, 112
    %v1693 = vpop.permute.xlu0 %1692
    %v1699 = vsel %vm699, %v1685, 0.0
    %1700 = vadd.xlane.f32.xlu0 %v1699
    %v1701 = vpop.xlane.xlu0 %1700
    %v1702 = vsel %vm699, %v1687, 0.0
    %1703 = vadd.xlane.f32.xlu0 %v1702
    %v1704 = vpop.xlane.xlu0 %1703
    %v1705 = vsel %vm699, %v1689, 0.0
    %1706 = vadd.xlane.f32.xlu0 %v1705
    %v1707 = vpop.xlane.xlu0 %1706
    %v1708 = vsel %vm699, %v1691, 0.0
    %1709 = vadd.xlane.f32.xlu0 %v1708
    %v1710 = vpop.xlane.xlu0 %1709
    %v1711 = vsel %vm699, %v1693, 0.0
    %1712 = vadd.xlane.f32.xlu0 %v1711
    %v1713 = vpop.xlane.xlu0 %1712
    %vm1714 = vcmask 7168
    %v1715 = vsel %vm1714, %v1641, %v1701
    %v1716 = vsel %vm1714, %v1644, %v1704
    %v1717 = vsel %vm1714, %v1647, %v1707
    %v1718 = vsel %vm1714, %v1650, %v1710
    %v1719 = vsel %vm1714, %v1653, %v1713
    %v1720 = vld [vmem:[%s13] sm:$0x3]
    %vm1721 = vcmask 15360
    %v1723 = vsel %vm1721, %v1715, 0
    %v1726 = vsel %vm1721, %v1716, 0
    %v1729 = vsel %vm1721, %v1717, 0
    %v1732 = vsel %vm1721, %v1718, 0
    %v1735 = vsel %vm1721, %v1719, 0
    %vm1737 = vcmask 1041408
    %v1739 = vsel %vm1737, %v1720, 0
    %1741 = vmatprep.subr.mxu0 0.0
    %1742 = vmatpush1.msra.mxu0 0.0
    %1743 = vmatprep.subr.mxu0 0.0
    %1744 = vmatpush1.msra.mxu0 0.0
    %1745 = vmatprep.subr.mxu0 0.0
    %1746 = vmatpush1.msra.mxu0 0.0
    %1747 = vmatprep.subr.mxu0 0.0
    %1748 = vmatpush1.msra.mxu0 0.0
    %1749 = vmatprep.subr.mxu0 0.0
    %1750 = vmatpush1.msra.mxu0 0.0
    %1751 = vmatprep.subr.mxu0 0.0
    %1752 = vmatpush1.msra.mxu0 0.0
    %1753 = vmatprep.subr.mxu0 0.0
    %1754 = vmatpush1.msra.mxu0 0.0
    %1755 = vmatprep.subr.mxu0 0.0
    %1756 = vmatpush1.msra.mxu0 0.0
    %1757 = vmatprep.subr.mxu0 0.0
    %1758 = vmatpush1.msra.mxu0 0.0
    %1759 = vmatprep.subr.mxu0 0.0
    %1760 = vmatpush1.msra.mxu0 0.0
    %1761 = vmatprep.subr.mxu0 0.0
    %1762 = vmatpush1.msra.mxu0 0.0
    %1763 = vmatprep.subr.mxu0 0.0
    %1764 = vmatpush1.msra.mxu0 0.0
    %1765 = vmatprep.subr.mxu0 0.0
    %1766 = vmatpush1.msra.mxu0 0.0
    %1767 = vmatprep.subr.mxu0 0.0
    %1768 = vmatpush1.msra.mxu0 0.0
    %1769 = vmatprep.subr.mxu0 0.0
    %1770 = vmatpush1.msra.mxu0 0.0
    %1771 = vmatprep.subr.mxu0 0.0
    %1772 = vmatpush1.msra.mxu0 %v1739
    %1773 = vmatprep.subr.mxu0 0.0
    %1774 = vmatpush2.msra.mxu0 0.0
    %1775 = vmatprep.subr.mxu0 0.0
    %1776 = vmatpush2.msra.mxu0 0.0
    %1777 = vmatprep.subr.mxu0 0.0
    %1778 = vmatpush2.msra.mxu0 0.0
    %1779 = vmatprep.subr.mxu0 0.0
    %1780 = vmatpush2.msra.mxu0 0.0
    %1781 = vmatprep.subr.mxu0 0.0
    %1782 = vmatpush2.msra.mxu0 0.0
    %1783 = vmatprep.subr.mxu0 0.0
    %1784 = vmatpush2.msra.mxu0 0.0
    %1785 = vmatprep.subr.mxu0 0.0
    %1786 = vmatpush2.msra.mxu0 0.0
    %1787 = vmatprep.subr.mxu0 0.0
    %1788 = vmatpush2.msra.mxu0 0.0
    %1789 = vmatprep.subr.mxu0 0.0
    %1790 = vmatpush2.msra.mxu0 0.0
    %1791 = vmatprep.subr.mxu0 0.0
    %1792 = vmatpush2.msra.mxu0 0.0
    %1793 = vmatprep.subr.mxu0 0.0
    %1794 = vmatpush2.msra.mxu0 0.0
    %1795 = vmatprep.subr.mxu0 0.0
    %1796 = vmatpush2.msra.mxu0 0.0
    %1797 = vmatprep.subr.mxu0 0.0
    %1798 = vmatpush2.msra.mxu0 0.0
    %1799 = vmatprep.subr.mxu0 0.0
    %1800 = vmatpush2.msra.mxu0 0.0
    %1801 = vmatprep.subr.mxu0 0.0
    %1802 = vmatpush2.msra.mxu0 0.0
    %1803 = vmatprep.subr.mxu0 0.0
    %1804 = vmatpush2.msra.mxu0 0.0
    %1805 = vmatprep.mubr.f32.mxu0 0.0
    %1806 = vmatmul.mubr.f32.gmra.mxu0 %v1723
    %v1807 = vpop.f32.mrf.mxu0
    %v1808 = vadd.f32 0.0, %v1807
    %v1809 = vpop.f32.mrf.mxu0
    %1810 = vmatprep.mubr.f32.mxu0 0.0
    %1811 = vmatmul.mubr.f32.gmra.mxu0 %v1726
    %v1812 = vpop.f32.mrf.mxu0
    %v1813 = vadd.f32 0.0, %v1812
    %v1814 = vpop.f32.mrf.mxu0
    %1815 = vmatprep.mubr.f32.mxu0 0.0
    %1816 = vmatmul.mubr.f32.gmra.mxu0 %v1729
    %v1817 = vpop.f32.mrf.mxu0
    %v1818 = vadd.f32 0.0, %v1817
    %v1819 = vpop.f32.mrf.mxu0
    %1820 = vmatprep.mubr.f32.mxu0 0.0
    %1821 = vmatmul.mubr.f32.gmra.mxu0 %v1732
    %v1822 = vpop.f32.mrf.mxu0
    %v1823 = vadd.f32 0.0, %v1822
    %v1824 = vpop.f32.mrf.mxu0
    %1825 = vmatprep.mubr.f32.mxu0 0.0
    %1826 = vmatmul.mubr.f32.gmra.mxu0 %v1735
    %v1827 = vpop.f32.mrf.mxu0
    %v1828 = vadd.f32 0.0, %v1827
    %v1829 = vpop.f32.mrf.mxu0
    %1830 = vdwg.mxu0
    %1831 = vst [vmem:[#allocation4] sm:$0xff] %v1808
    %1832 = vst [vmem:[#allocation4 + $0x8] sm:$0xff] %v1813
    %1833 = vst [vmem:[#allocation4 + $0x10] sm:$0xff] %v1818
    %1834 = vst [vmem:[#allocation4 + $0x18] sm:$0xff] %v1823
    %1835 = vst [vmem:[#allocation4 + $0x20] sm:$0xff] %v1828
    // Predicated region
    $region58: #{tpu_custom_call.1} parent=1 // pred_check
      _
    $region59: #{tpu_custom_call.1} parent=1 // pred_check_branch
      %1837 = sbr.rel (0) target = $region61
    $region60: #{tpu_custom_call.1} parent=1 // pred_region
      %s1839 = ssub.s32 256, 256
      %1840 = vsyncadd [#allocation3], %s1839
      %s1841 = sshll.u32 [#allocation2], 4
      %s1842 = int_to_ptr.vmem [resolvable:$true] %s1841
      %1847 = dma.vmem_to_hbm [thread:$0]  %s1842, 256, %s14, [#allocation3], 128, 128, 8
    $region61: #{tpu_custom_call.1} parent=1 // pred_fallthru
      _
    // Predicated region
    $region62: #{tpu_custom_call.1} parent=1 // pred_check
      _
    $region63: #{tpu_custom_call.1} parent=1 // pred_check_branch
      %1849 = sbr.rel (0) target = $region65
    $region64: #{tpu_custom_call.1} parent=1 // pred_region
      _
    $region65: #{tpu_custom_call.1} parent=1 // pred_fallthru
      _
    // Predicated region
    $region66: #{tpu_custom_call.1} parent=1 // pred_check
      _
    $region67: #{tpu_custom_call.1} parent=1 // pred_check_branch
      %1851 = sbr.rel (0) target = $region69
    $region68: #{tpu_custom_call.1} parent=1 // pred_region
      %s1853 = ssub.s32 640, 640
      %1854 = vsyncadd [#allocation5], %s1853
      %s1855 = sshll.u32 [#allocation4], 4
      %s1856 = int_to_ptr.vmem [resolvable:$true] %s1855
      %1861 = dma.vmem_to_hbm [thread:$0]  %s1856, 640, %s16, [#allocation5], 128, 128, 8
    $region69: #{tpu_custom_call.1} parent=1 // pred_fallthru
      _
    // Predicated region
    $region70: #{tpu_custom_call.1} parent=1 // pred_check
      _
    $region71: #{tpu_custom_call.1} parent=1 // pred_check_branch
      %1863 = sbr.rel (0) target = $region73
    $region72: #{tpu_custom_call.1} parent=1 // pred_region
      %1864 = dma.done [#allocation3], 256
    $region73: #{tpu_custom_call.1} parent=1 // pred_fallthru
      _
    // Predicated region
    $region74: #{tpu_custom_call.1} parent=1 // pred_check
      _
    $region75: #{tpu_custom_call.1} parent=1 // pred_check_branch
      %1866 = sbr.rel (0) target = $region77
    $region76: #{tpu_custom_call.1} parent=1 // pred_region
      _
    $region77: #{tpu_custom_call.1} parent=1 // pred_fallthru
      _
    // Predicated region
    $region78: #{tpu_custom_call.1} parent=1 // pred_check
      _
    $region79: #{tpu_custom_call.1} parent=1 // pred_check_branch
      %1868 = sbr.rel (0) target = $region81
    $region80: #{tpu_custom_call.1} parent=1 // pred_region
      %1869 = dma.done [#allocation5], 640
    $region81: #{tpu_custom_call.1} parent=1 // pred_fallthru
      _
    %1870 = vsyncpa [#allocation3], 1
    %1871 = vsyncpa [#allocation5], 1

</llo_original>
